<compile_context>
chip_gen: v7x
topology: tpu7x:2x2x1
jax: 0.10.0
libtpu: 0.0.40
codegen_flags: <defaults>
</compile_context>

<pallas_src>
import jax
import jax.numpy as jnp
from jax.experimental import pallas as pl
from jax.experimental.pallas import tpu as pltpu

HIDDEN = 512
LANES = 128
VMEM_SOFT_CAP = 56 << 20   # stay well inside v7x's 64 MiB physical VMEM


def _round_up(n, m):
    return ((n + m - 1) // m) * m


def _mlp_kernel(x_ref, w1_ref, b1_ref, w2_ref, b2_ref, w3_ref, b3_ref, o_ref):
    # f32 -> bf16 cast (no-op when x was pre-padded to bf16); hides under MXU.
    xb = x_ref[...].astype(jnp.bfloat16)

    # Layer 1: Linear + (dropout = identity) + ReLU. bf16 MXU, f32 accumulate.
    h = jnp.dot(xb, w1_ref[...], preferred_element_type=jnp.float32)
    h = jnp.maximum(h + b1_ref[...], 0.0)

    # Hidden layer: Linear(512, 512) + (dropout = identity) + ReLU.
    h = jnp.dot(h.astype(jnp.bfloat16), w2_ref[...],
                preferred_element_type=jnp.float32)
    h = jnp.maximum(h + b2_ref[...], 0.0)
    # TODO(synk): on v6e/v7x the bias+ReLU epilogue could run in bf16 (packed
    #             vregs, half the VALU work); kept f32 for v5e correctness.

    # Output layer: Linear(512, n_outputs), no activation.
    out = jnp.dot(h.astype(jnp.bfloat16), w3_ref[...],
                  preferred_element_type=jnp.float32)
    o_ref[...] = (out + b3_ref[...]).astype(o_ref.dtype)


def prepare_params(params):
    """One-time padding + bf16 cast of weights/biases (hoisted out of the
    per-call path). Call once at init; reuse the result for every forward."""
    w1, b1, w2, b2, w3, b3 = params
    n_in, n_out = int(w1.shape[0]), int(w3.shape[1])
    n_in_p = _round_up(n_in, LANES)
    n_out_p = _round_up(n_out, LANES)

    w1_p = jnp.zeros((n_in_p, HIDDEN), jnp.bfloat16).at[:n_in, :].set(
        w1.astype(jnp.bfloat16))
    w2_p = w2.astype(jnp.bfloat16)
    w3_p = jnp.zeros((HIDDEN, n_out_p), jnp.bfloat16).at[:, :n_out].set(
        w3.astype(jnp.bfloat16))
    b1_p = b1.astype(jnp.float32).reshape(1, HIDDEN)
    b2_p = b2.astype(jnp.float32).reshape(1, HIDDEN)
    b3_p = jnp.zeros((1, n_out_p), jnp.float32).at[:, :n_out].set(
        b3.astype(jnp.float32).reshape(1, n_out))

    return dict(w1=w1_p, b1=b1_p, w2=w2_p, b2=b2_p, w3=w3_p, b3=b3_p,
                n_in=n_in, n_out=n_out, n_in_p=n_in_p, n_out_p=n_out_p)


def _vmem_need(tile_b, n_in_p, n_out_p, x_itemsize):
    """Approximate VMEM working set in bytes for one pipelined grid step."""
    w = 2 * 2 * (n_in_p * HIDDEN + HIDDEN * HIDDEN + HIDDEN * n_out_p)  # bf16, 2 bufs
    b = 2 * 4 * (2 * HIDDEN + n_out_p)                                  # f32 biases
    x = 2 * x_itemsize * tile_b * n_in_p                                # x tiles (2 bufs)
    o = 2 * 4 * tile_b * n_out_p                                        # f32 out tiles
    h = 3 * 4 * tile_b * HIDDEN                                         # f32 intermediates
    return w + b + x + o + h


def mlp_forward(x, prepared, *, tile_b=None):
    """Fused MLP forward. x: [B, n_inputs] f32; prepared = prepare_params(...).
    Returns [B, n_outputs] f32."""
    n_in, n_out = prepared["n_in"], prepared["n_out"]
    n_in_p, n_out_p = prepared["n_in_p"], prepared["n_out_p"]
    B = x.shape[0]
    assert x.shape[1] == n_in, (x.shape, n_in)

    # Pad batch only to the next 128 multiple (not a whole tile).
    B_p = _round_up(max(B, 1), LANES)

    auto_tile = tile_b is None
    if auto_tile:
        candidates = [t for t in (512, 256, 128) if B_p % t == 0]
        if B_p >= 512:
            # Guarantee >= 2 grid steps so v7x's two TensorCores both get work.
            two_step = [t for t in candidates if B_p // t >= 2]
            candidates = two_step or candidates
        tile_b = max(candidates)
    else:
        B_p = _round_up(B_p, tile_b)

    # Will x need a padded copy? (If so it is padded straight to bf16.)
    need_pad_x = (B_p != B) or (n_in_p != n_in)
    x_itemsize = 2 if need_pad_x else x.dtype.itemsize

    # Keep the working set inside the v7x-safe VMEM budget by shrinking the
    # batch tile (auto-selected tiles only) instead of silently clamping.
    if auto_tile:
        while tile_b > 128 and _vmem_need(tile_b, n_in_p, n_out_p,
                                          x_itemsize) > VMEM_SOFT_CAP:
            tile_b //= 2
    # TODO(synk): if even tile_b=128 blows the budget (very large n_inputs on
    #             v7x), add a K grid axis with an f32 accumulator scratch +
    #             pl.when init/finalize, and mark the resident weight specs
    #             pipeline_mode=pl.Buffered(1) to drop the second weight buffer.
    vmem_bytes = int(min(max(_vmem_need(tile_b, n_in_p, n_out_p, x_itemsize)
                             + (4 << 20), 16 << 20), 64 << 20))

    grid = (B_p // tile_b,)

    if need_pad_x:
        # Must materialize a padded copy anyway -> pad straight to bf16 so the
        # kernel reads 2 B/elem.
        x_in = jnp.zeros((B_p, n_in_p), jnp.bfloat16).at[:B, :n_in].set(
            x.astype(jnp.bfloat16))
    else:
        # Lane-aligned: no wrapper pass over x; bf16 cast happens in-kernel.
        x_in = x

    flops = 2 * B_p * (n_in_p * HIDDEN + HIDDEN * HIDDEN + HIDDEN * n_out_p)
    bytes_accessed = (x_in.size * x_in.dtype.itemsize
                      + 2 * (n_in_p * HIDDEN + HIDDEN * HIDDEN + HIDDEN * n_out_p)
                      + 4 * (2 * HIDDEN + n_out_p)
                      + 4 * B_p * n_out_p)
    cost = pl.CostEstimate(flops=flops, transcendentals=0,
                           bytes_accessed=bytes_accessed)

    out = pl.pallas_call(
        _mlp_kernel,
        out_shape=jax.ShapeDtypeStruct((B_p, n_out_p), jnp.float32),
        grid=grid,
        in_specs=[
            pl.BlockSpec((tile_b, n_in_p), lambda i: (i, 0)),    # x: per batch tile
            pl.BlockSpec((n_in_p, HIDDEN), lambda i: (0, 0)),    # w1: VMEM-resident
            pl.BlockSpec((1, HIDDEN), lambda i: (0, 0)),         # b1
            pl.BlockSpec((HIDDEN, HIDDEN), lambda i: (0, 0)),    # w2
            pl.BlockSpec((1, HIDDEN), lambda i: (0, 0)),         # b2
            pl.BlockSpec((HIDDEN, n_out_p), lambda i: (0, 0)),   # w3
            pl.BlockSpec((1, n_out_p), lambda i: (0, 0)),        # b3
        ],
        out_specs=pl.BlockSpec((tile_b, n_out_p), lambda i: (i, 0)),
        compiler_params=pltpu.CompilerParams(
            dimension_semantics=("parallel",),
            vmem_limit_bytes=vmem_bytes,
        ),
        cost_estimate=cost,
    )(x_in, prepared["w1"], prepared["b1"], prepared["w2"], prepared["b2"],
      prepared["w3"], prepared["b3"])

    if B_p != B or n_out_p != n_out:
        out = out[:B, :n_out]
    return out


def init_params(key, n_inputs, n_outputs):
    """Deterministic parameter init (PyTorch nn.Linear-style uniform ranges)."""
    ks = jax.random.split(key, 6)

    def linear(kw, kb, fan_in, fan_out):
        bound = 1.0 / jnp.sqrt(float(fan_in))
        w = jax.random.uniform(kw, (fan_in, fan_out), jnp.float32, -bound, bound)
        b = jax.random.uniform(kb, (fan_out,), jnp.float32, -bound, bound)
        return w, b

    w1, b1 = linear(ks[0], ks[1], n_inputs, HIDDEN)
    w2, b2 = linear(ks[2], ks[3], HIDDEN, HIDDEN)
    w3, b3 = linear(ks[4], ks[5], HIDDEN, n_outputs)
    return (w1, b1, w2, b2, w3, b3)


def mlp_reference(x, params):
    """Reference with the same numerics as the kernel (bf16 MXU ops, f32 acc)."""
    w1, b1, w2, b2, w3, b3 = params
    w1b, w2b, w3b = (w.astype(jnp.bfloat16) for w in (w1, w2, w3))
    h = jnp.dot(x.astype(jnp.bfloat16), w1b, preferred_element_type=jnp.float32)
    h = jnp.maximum(h + b1, 0.0)
    h = jnp.dot(h.astype(jnp.bfloat16), w2b, preferred_element_type=jnp.float32)
    h = jnp.maximum(h + b2, 0.0)
    out = jnp.dot(h.astype(jnp.bfloat16), w3b, preferred_element_type=jnp.float32)
    return out + b3


if __name__ == "__main__":
    key = jax.random.PRNGKey(0)
    k_x, k_p, k_x2, k_p2 = jax.random.split(key, 4)

    # Case 1: small, unaligned shapes (exercises the padded-x path).
    B, n_inputs, n_outputs = 8, 32, 16
    x = jax.random.normal(k_x, (B, n_inputs), jnp.float32)
    params = init_params(k_p, n_inputs, n_outputs)
    prepared = prepare_params(params)          # one-time weight prep (hoisted)
    out = jax.block_until_ready(mlp_forward(x, prepared))
    ref = mlp_reference(x, params)
    assert out.shape == (B, n_outputs), out.shape
    assert jnp.allclose(out, ref, atol=1e-2, rtol=1e-2), \
        "mismatch vs reference (padded path)"

    # Case 2: lane-aligned shapes (no wrapper pad/cast of x; in-kernel cast).
    B2, n_in2, n_out2 = 256, 128, 128
    x2 = jax.random.normal(k_x2, (B2, n_in2), jnp.float32)
    params2 = init_params(k_p2, n_in2, n_out2)
    prepared2 = prepare_params(params2)
    out2 = jax.block_until_ready(mlp_forward(x2, prepared2))
    ref2 = mlp_reference(x2, params2)
    assert out2.shape == (B2, n_out2), out2.shape
    assert jnp.allclose(out2, ref2, atol=1e-2, rtol=1e-2), \
        "mismatch vs reference (aligned path)"

    print("KERNEL_OK")
</pallas_src>

<mosaic_0001>
module attributes {stable_mosaic.version = 11 : i64} {
  func.func @_mlp_kernel(%arg0: i32, %arg1: memref<128x128xbf16, #tpu.memory_space<vmem>>, %arg2: memref<128x512xbf16, #tpu.memory_space<vmem>>, %arg3: memref<1x512xf32, #tpu.memory_space<vmem>>, %arg4: memref<512x512xbf16, #tpu.memory_space<vmem>>, %arg5: memref<1x512xf32, #tpu.memory_space<vmem>>, %arg6: memref<512x128xbf16, #tpu.memory_space<vmem>>, %arg7: memref<1x128xf32, #tpu.memory_space<vmem>>, %arg8: memref<128x128xf32, #tpu.memory_space<vmem>>) attributes {dimension_semantics = [#tpu.dimension_semantics<parallel>], iteration_bounds = array<i64: 1>, scalar_prefetch = 0 : i64, scratch_operands = 0 : i64, tpu.core_type = #tpu.core_type<tc>, window_params = [{transform_indices = @transform_0, window_bounds = array<i64: 128, 128>}, {pipeline_mode = #tpu.pipeline_mode<synchronous>, transform_indices = @transform_1, window_bounds = array<i64: 128, 512>}, {pipeline_mode = #tpu.pipeline_mode<synchronous>, transform_indices = @transform_2, window_bounds = array<i64: 1, 512>}, {pipeline_mode = #tpu.pipeline_mode<synchronous>, transform_indices = @transform_3, window_bounds = array<i64: 512, 512>}, {pipeline_mode = #tpu.pipeline_mode<synchronous>, transform_indices = @transform_4, window_bounds = array<i64: 1, 512>}, {pipeline_mode = #tpu.pipeline_mode<synchronous>, transform_indices = @transform_5, window_bounds = array<i64: 512, 128>}, {pipeline_mode = #tpu.pipeline_mode<synchronous>, transform_indices = @transform_6, window_bounds = array<i64: 1, 128>}, {transform_indices = @transform_7, window_bounds = array<i64: 128, 128>}]} {
    %c0 = arith.constant 0 : index
    %c0_0 = arith.constant 0 : index
    %0 = vector.load %arg1[%c0, %c0_0] : memref<128x128xbf16, #tpu.memory_space<vmem>>, vector<128x128xbf16>
    %c0_1 = arith.constant 0 : index
    %c0_2 = arith.constant 0 : index
    %1 = vector.load %arg2[%c0_1, %c0_2] : memref<128x512xbf16, #tpu.memory_space<vmem>>, vector<128x512xbf16>
    %cst = arith.constant dense<0.000000e+00> : vector<128x512xf32>
    %2 = tpu.matmul %0, %1, %cst {dimension_numbers = #tpu.dot_dimension_numbers<[1], [0], [0], [1], [0, 0, 1, 1], [], []>} : vector<128x128xbf16>, vector<128x512xbf16>, vector<128x512xf32> -> vector<128x512xf32>
    %c0_3 = arith.constant 0 : index
    %c0_4 = arith.constant 0 : index
    %3 = vector.load %arg3[%c0_3, %c0_4] : memref<1x512xf32, #tpu.memory_space<vmem>>, vector<1x512xf32>
    %4 = vector.broadcast %3 : vector<1x512xf32> to vector<128x512xf32>
    %5 = arith.addf %2, %4 : vector<128x512xf32>
    %cst_5 = arith.constant 0.000000e+00 : f32
    %6 = vector.broadcast %cst_5 : f32 to vector<128x512xf32>
    %7 = arith.maximumf %5, %6 : vector<128x512xf32>
    %8 = arith.truncf %7 : vector<128x512xf32> to vector<128x512xbf16>
    %c0_6 = arith.constant 0 : index
    %c0_7 = arith.constant 0 : index
    %9 = vector.load %arg4[%c0_6, %c0_7] : memref<512x512xbf16, #tpu.memory_space<vmem>>, vector<512x512xbf16>
    %cst_8 = arith.constant dense<0.000000e+00> : vector<128x512xf32>
    %10 = tpu.matmul %8, %9, %cst_8 {dimension_numbers = #tpu.dot_dimension_numbers<[1], [0], [0], [1], [0, 0, 1, 1], [], []>} : vector<128x512xbf16>, vector<512x512xbf16>, vector<128x512xf32> -> vector<128x512xf32>
    %c0_9 = arith.constant 0 : index
    %c0_10 = arith.constant 0 : index
    %11 = vector.load %arg5[%c0_9, %c0_10] : memref<1x512xf32, #tpu.memory_space<vmem>>, vector<1x512xf32>
    %12 = vector.broadcast %11 : vector<1x512xf32> to vector<128x512xf32>
    %13 = arith.addf %10, %12 : vector<128x512xf32>
    %cst_11 = arith.constant 0.000000e+00 : f32
    %14 = vector.broadcast %cst_11 : f32 to vector<128x512xf32>
    %15 = arith.maximumf %13, %14 : vector<128x512xf32>
    %16 = arith.truncf %15 : vector<128x512xf32> to vector<128x512xbf16>
    %c0_12 = arith.constant 0 : index
    %c0_13 = arith.constant 0 : index
    %17 = vector.load %arg6[%c0_12, %c0_13] : memref<512x128xbf16, #tpu.memory_space<vmem>>, vector<512x128xbf16>
    %cst_14 = arith.constant dense<0.000000e+00> : vector<128x128xf32>
    %18 = tpu.matmul %16, %17, %cst_14 {dimension_numbers = #tpu.dot_dimension_numbers<[1], [0], [0], [1], [0, 0, 1, 1], [], []>} : vector<128x512xbf16>, vector<512x128xbf16>, vector<128x128xf32> -> vector<128x128xf32>
    %c0_15 = arith.constant 0 : index
    %c0_16 = arith.constant 0 : index
    %19 = vector.load %arg7[%c0_15, %c0_16] : memref<1x128xf32, #tpu.memory_space<vmem>>, vector<1x128xf32>
    %20 = vector.broadcast %19 : vector<1x128xf32> to vector<128x128xf32>
    %21 = arith.addf %18, %20 : vector<128x128xf32>
    %c0_17 = arith.constant 0 : index
    %c0_18 = arith.constant 0 : index
    %22 = vector.load %arg8[%c0_17, %c0_18] : memref<128x128xf32, #tpu.memory_space<vmem>>, vector<128x128xf32>
    tpu.vector_store %arg8[%c0_17, %c0_18], %21 {strides = array<i32>} : memref<128x128xf32, #tpu.memory_space<vmem>>, vector<128x128xf32>,
    return
  }
  func.func @transform_0(%arg0: i32) -> (i32, i32) {
    %c0_i32 = arith.constant 0 : i32
    %c0_i32_0 = arith.constant 0 : i32
    return %arg0, %c0_i32 : i32, i32
  }
  func.func @transform_1(%arg0: i32) -> (i32, i32) {
    %c0_i32 = arith.constant 0 : i32
    %c0_i32_0 = arith.constant 0 : i32
    %c0_i32_1 = arith.constant 0 : i32
    return %c0_i32, %c0_i32_0 : i32, i32
  }
  func.func @transform_2(%arg0: i32) -> (i32, i32) {
    %c0_i32 = arith.constant 0 : i32
    %c0_i32_0 = arith.constant 0 : i32
    %c0_i32_1 = arith.constant 0 : i32
    return %c0_i32, %c0_i32_0 : i32, i32
  }
  func.func @transform_3(%arg0: i32) -> (i32, i32) {
    %c0_i32 = arith.constant 0 : i32
    %c0_i32_0 = arith.constant 0 : i32
    %c0_i32_1 = arith.constant 0 : i32
    return %c0_i32, %c0_i32_0 : i32, i32
  }
  func.func @transform_4(%arg0: i32) -> (i32, i32) {
    %c0_i32 = arith.constant 0 : i32
    %c0_i32_0 = arith.constant 0 : i32
    %c0_i32_1 = arith.constant 0 : i32
    return %c0_i32, %c0_i32_0 : i32, i32
  }
  func.func @transform_5(%arg0: i32) -> (i32, i32) {
    %c0_i32 = arith.constant 0 : i32
    %c0_i32_0 = arith.constant 0 : i32
    %c0_i32_1 = arith.constant 0 : i32
    return %c0_i32, %c0_i32_0 : i32, i32
  }
  func.func @transform_6(%arg0: i32) -> (i32, i32) {
    %c0_i32 = arith.constant 0 : i32
    %c0_i32_0 = arith.constant 0 : i32
    %c0_i32_1 = arith.constant 0 : i32
    return %c0_i32, %c0_i32_0 : i32, i32
  }
  func.func @transform_7(%arg0: i32) -> (i32, i32) {
    %c0_i32 = arith.constant 0 : i32
    %c0_i32_0 = arith.constant 0 : i32
    return %arg0, %c0_i32 : i32, i32
  }
}

</mosaic_0001>

<llo_original>
// kernel: tpu_custom_call.1
$region0: #{tpu_custom_call.1}
  #allocation0 [shape = 'u32[]', space=smem, size = 0x4, offset = 0x4, fixed_abs, tag = 'smem constant byte address 0x4 - core index']
  #allocation1 [shape = 'u32[144,128]{1,0:T(1,128)}', space=vmem, size = 0x12000, scoped, tag = 'internal scratch']
  %s0 = inlined_call_operand.hbm [shape: bf16[128,128], index: 0, kind: input, shape index: {}]
  %s1 = inlined_call_operand.hbm [shape: bf16[128,512], index: 1, kind: input, shape index: {}]
  %s2 = inlined_call_operand.vmem [shape: f32[1,512], index: 2, kind: input, shape index: {}]
  %s3 = inlined_call_operand.hbm [shape: bf16[512,512], index: 3, kind: input, shape index: {}]
  %s4 = inlined_call_operand.vmem [shape: f32[1,512], index: 4, kind: input, shape index: {}]
  %s5 = inlined_call_operand.hbm [shape: bf16[512,128], index: 5, kind: input, shape index: {}]
  %s6 = inlined_call_operand.vmem [shape: f32[1,128], index: 6, kind: input, shape index: {}]
  %s7 = inlined_call_operand.hbm [shape: f32[128,128], index: 7, kind: output, shape index: {}]
  %s8 = sld [smem:[#allocation0]]
  $region54: #{tpu_custom_call.1} parent=0
    _
  %s10 = ssub.s32 1, %s8
  %s11 = scalar_select 0, %s10, %s8
  $region1: #{tpu_custom_call.1} parent=0
    #allocation2 [shape = 'u8[32768]{0}', space=vmem, size = 0x8000, scoped, tag = 'input window, operand 0, single buffered']
    #allocation3 [shape = 's32[1]{0}', space=sflag, size = 0x4, scoped, tag = 'scoped memory for tpu_custom_call.1']
    #allocation4 [shape = 's32[1]{0}', space=sflag, size = 0x4, scoped, tag = 'scoped memory for tpu_custom_call.1']
    #allocation5 [shape = 'u8[131072]{0}', space=vmem, size = 0x20000, scoped, tag = 'input window, operand 1, single buffered']
    #allocation6 [shape = 's32[1]{0}', space=sflag, size = 0x4, scoped, tag = 'scoped memory for tpu_custom_call.1']
    #allocation7 [shape = 'u8[524288]{0}', space=vmem, size = 0x80000, scoped, tag = 'input window, operand 3, single buffered']
    #allocation8 [shape = 'u8[131072]{0}', space=vmem, size = 0x20000, scoped, tag = 'input window, operand 5, single buffered']
    #allocation9 [shape = 's32[1]{0}', space=sflag, size = 0x4, scoped, tag = 'scoped memory for tpu_custom_call.1']
    #allocation10 [shape = 'u8[65536]{0}', space=vmem, size = 0x10000, scoped, tag = 'output window, operand 0, single buffered']
    %12 = vsyncpa [#allocation3], 0
    %13 = vsyncpa [#allocation6], 0
    %14 = vsyncpa [#allocation9], 0
    %15 = vsyncpa [#allocation4], 0
    // Predicated region
    $region2: #{tpu_custom_call.1} parent=1 // pred_check
      _
    $region3: #{tpu_custom_call.1} parent=1 // pred_check_branch
      %17 = sbr.rel (0) target = $region5
    $region4: #{tpu_custom_call.1} parent=1 // pred_region
      %s19 = ssub.s32 1024, 1024
      %20 = vsyncadd [#allocation3], %s19
      %s21 = sshll.u32 [#allocation2], 4
      %s22 = int_to_ptr.vmem [resolvable:$true] %s21
      %27 = dma.hbm_to_vmem [thread:$0]  %s0, 1024, %s22, [#allocation3], 64, 64, 4
    $region5: #{tpu_custom_call.1} parent=1 // pred_fallthru
      _
    // Predicated region
    $region6: #{tpu_custom_call.1} parent=1 // pred_check
      _
    $region7: #{tpu_custom_call.1} parent=1 // pred_check_branch
      %29 = sbr.rel (0) target = $region9
    $region8: #{tpu_custom_call.1} parent=1 // pred_region
      %s31 = ssub.s32 4096, 4096
      %32 = vsyncadd [#allocation6], %s31
      %s33 = sshll.u32 [#allocation5], 4
      %s34 = int_to_ptr.vmem [resolvable:$true] %s33
      %39 = dma.hbm_to_vmem [thread:$0]  %s1, 4096, %s34, [#allocation6], 256, 256, 16
    $region9: #{tpu_custom_call.1} parent=1 // pred_fallthru
      _
    // Predicated region
    $region10: #{tpu_custom_call.1} parent=1 // pred_check
      _
    $region11: #{tpu_custom_call.1} parent=1 // pred_check_branch
      %41 = sbr.rel (0) target = $region13
    $region12: #{tpu_custom_call.1} parent=1 // pred_region
      _
    $region13: #{tpu_custom_call.1} parent=1 // pred_fallthru
      _
    // Predicated region
    $region14: #{tpu_custom_call.1} parent=1 // pred_check
      _
    $region15: #{tpu_custom_call.1} parent=1 // pred_check_branch
      %43 = sbr.rel (0) target = $region17
    $region16: #{tpu_custom_call.1} parent=1 // pred_region
      %s45 = ssub.s32 16384, 16384
      %46 = vsyncadd [#allocation6], %s45
      %s47 = sshll.u32 [#allocation7], 4
      %s48 = int_to_ptr.vmem [resolvable:$true] %s47
      %53 = dma.hbm_to_vmem [thread:$0]  %s3, 16384, %s48, [#allocation6], 256, 256, 16
    $region17: #{tpu_custom_call.1} parent=1 // pred_fallthru
      _
    // Predicated region
    $region18: #{tpu_custom_call.1} parent=1 // pred_check
      _
    $region19: #{tpu_custom_call.1} parent=1 // pred_check_branch
      %55 = sbr.rel (0) target = $region21
    $region20: #{tpu_custom_call.1} parent=1 // pred_region
      _
    $region21: #{tpu_custom_call.1} parent=1 // pred_fallthru
      _
    // Predicated region
    $region22: #{tpu_custom_call.1} parent=1 // pred_check
      _
    $region23: #{tpu_custom_call.1} parent=1 // pred_check_branch
      %57 = sbr.rel (0) target = $region25
    $region24: #{tpu_custom_call.1} parent=1 // pred_region
      %s59 = ssub.s32 4096, 4096
      %60 = vsyncadd [#allocation9], %s59
      %s61 = sshll.u32 [#allocation8], 4
      %s62 = int_to_ptr.vmem [resolvable:$true] %s61
      %67 = dma.hbm_to_vmem [thread:$0]  %s5, 4096, %s62, [#allocation9], 64, 64, 4
    $region25: #{tpu_custom_call.1} parent=1 // pred_fallthru
      _
    // Predicated region
    $region26: #{tpu_custom_call.1} parent=1 // pred_check
      _
    $region27: #{tpu_custom_call.1} parent=1 // pred_check_branch
      %69 = sbr.rel (0) target = $region29
    $region28: #{tpu_custom_call.1} parent=1 // pred_region
      _
    $region29: #{tpu_custom_call.1} parent=1 // pred_fallthru
      _
    // Predicated region
    $region30: #{tpu_custom_call.1} parent=1 // pred_check
      _
    $region31: #{tpu_custom_call.1} parent=1 // pred_check_branch
      %71 = sbr.rel (0) target = $region33
    $region32: #{tpu_custom_call.1} parent=1 // pred_region
      %72 = dma.done [#allocation3], 1024
    $region33: #{tpu_custom_call.1} parent=1 // pred_fallthru
      _
    // Predicated region
    $region34: #{tpu_custom_call.1} parent=1 // pred_check
      _
    $region35: #{tpu_custom_call.1} parent=1 // pred_check_branch
      %74 = sbr.rel (0) target = $region37
    $region36: #{tpu_custom_call.1} parent=1 // pred_region
      %75 = dma.done [#allocation6], 4096
    $region37: #{tpu_custom_call.1} parent=1 // pred_fallthru
      _
    // Predicated region
    $region38: #{tpu_custom_call.1} parent=1 // pred_check
      _
    $region39: #{tpu_custom_call.1} parent=1 // pred_check_branch
      %77 = sbr.rel (0) target = $region41
    $region40: #{tpu_custom_call.1} parent=1 // pred_region
      %78 = dma.done [#allocation6], 16384
    $region41: #{tpu_custom_call.1} parent=1 // pred_fallthru
      _
    // Predicated region
    $region42: #{tpu_custom_call.1} parent=1 // pred_check
      _
    $region43: #{tpu_custom_call.1} parent=1 // pred_check_branch
      %80 = sbr.rel (0) target = $region45
    $region44: #{tpu_custom_call.1} parent=1 // pred_region
      %81 = dma.done [#allocation9], 4096
    $region45: #{tpu_custom_call.1} parent=1 // pred_fallthru
      _
    %v83 = vld [vmem:[#allocation2] sm:$0xf]
    %v84 = vld [vmem:[#allocation2 + $0x4] sm:$0xf]
    %v85 = vld [vmem:[#allocation2 + $0x8] sm:$0xf]
    %v86 = vld [vmem:[#allocation2 + $0xc] sm:$0xf]
    %v87 = vld [vmem:[#allocation2 + $0x10] sm:$0xf]
    %v88 = vld [vmem:[#allocation2 + $0x14] sm:$0xf]
    %v89 = vld [vmem:[#allocation2 + $0x18] sm:$0xf]
    %v90 = vld [vmem:[#allocation2 + $0x1c] sm:$0xf]
    %v91 = vld [vmem:[#allocation2 + $0x20] sm:$0xf]
    %v92 = vld [vmem:[#allocation2 + $0x24] sm:$0xf]
    %v93 = vld [vmem:[#allocation2 + $0x28] sm:$0xf]
    %v94 = vld [vmem:[#allocation2 + $0x2c] sm:$0xf]
    %v95 = vld [vmem:[#allocation2 + $0x30] sm:$0xf]
    %v96 = vld [vmem:[#allocation2 + $0x34] sm:$0xf]
    %v97 = vld [vmem:[#allocation2 + $0x38] sm:$0xf]
    %v98 = vld [vmem:[#allocation2 + $0x3c] sm:$0xf]
    %v99 = vld [vmem:[#allocation5] sm:$0xff]
    %v100 = vld [vmem:[#allocation5 + $0x8] sm:$0xff]
    %v101 = vld [vmem:[#allocation5 + $0x10] sm:$0xff]
    %v102 = vld [vmem:[#allocation5 + $0x18] sm:$0xff]
    %v103 = vld [vmem:[#allocation5 + $0x20] sm:$0xff]
    %v104 = vld [vmem:[#allocation5 + $0x28] sm:$0xff]
    %v105 = vld [vmem:[#allocation5 + $0x30] sm:$0xff]
    %v106 = vld [vmem:[#allocation5 + $0x38] sm:$0xff]
    %v107 = vld [vmem:[#allocation5 + $0x40] sm:$0xff]
    %v108 = vld [vmem:[#allocation5 + $0x48] sm:$0xff]
    %v109 = vld [vmem:[#allocation5 + $0x50] sm:$0xff]
    %v110 = vld [vmem:[#allocation5 + $0x58] sm:$0xff]
    %v111 = vld [vmem:[#allocation5 + $0x60] sm:$0xff]
    %v112 = vld [vmem:[#allocation5 + $0x68] sm:$0xff]
    %v113 = vld [vmem:[#allocation5 + $0x70] sm:$0xff]
    %v114 = vld [vmem:[#allocation5 + $0x78] sm:$0xff]
    %v115 = vld [vmem:[#allocation5 + $0x80] sm:$0xff]
    %v116 = vld [vmem:[#allocation5 + $0x88] sm:$0xff]
    %v117 = vld [vmem:[#allocation5 + $0x90] sm:$0xff]
    %v118 = vld [vmem:[#allocation5 + $0x98] sm:$0xff]
    %v119 = vld [vmem:[#allocation5 + $0xa0] sm:$0xff]
    %v120 = vld [vmem:[#allocation5 + $0xa8] sm:$0xff]
    %v121 = vld [vmem:[#allocation5 + $0xb0] sm:$0xff]
    %v122 = vld [vmem:[#allocation5 + $0xb8] sm:$0xff]
    %v123 = vld [vmem:[#allocation5 + $0xc0] sm:$0xff]
    %v124 = vld [vmem:[#allocation5 + $0xc8] sm:$0xff]
    %v125 = vld [vmem:[#allocation5 + $0xd0] sm:$0xff]
    %v126 = vld [vmem:[#allocation5 + $0xd8] sm:$0xff]
    %v127 = vld [vmem:[#allocation5 + $0xe0] sm:$0xff]
    %v128 = vld [vmem:[#allocation5 + $0xe8] sm:$0xff]
    %v129 = vld [vmem:[#allocation5 + $0xf0] sm:$0xff]
    %v130 = vld [vmem:[#allocation5 + $0xf8] sm:$0xff]
    %v131 = vld [vmem:[%s2] sm:$0xf]
    %v133 = vlaneseq
    %v134 = vshrl.u32 %v133, 7
    %v135 = vsub.s32 0, %v134
    %v136 = vrot.slane %v131, %v135
    %v137 = vlaneseq
    %v138 = vshrl.u32 %v137, 7
    %v139 = vsub.s32 1, %v138
    %v140 = vrot.slane %v131, %v139
    %v141 = vlaneseq
    %v142 = vshrl.u32 %v141, 7
    %v143 = vsub.s32 2, %v142
    %v144 = vrot.slane %v131, %v143
    %v145 = vlaneseq
    %v146 = vshrl.u32 %v145, 7
    %v147 = vsub.s32 3, %v146
    %v148 = vrot.slane %v131, %v147
    %v169 = vunpack.c.l.b16 %v83
    %v170 = vunpack.c.l.b16 %v84
    %v171 = vunpack.c.l.b16 %v85
    %v172 = vunpack.c.l.b16 %v86
    %v173 = vunpack.c.l.b16 %v87
    %v174 = vunpack.c.l.b16 %v88
    %v175 = vunpack.c.l.b16 %v89
    %v176 = vunpack.c.l.b16 %v90
    %v177 = vunpack.c.l.b16 %v91
    %v178 = vunpack.c.l.b16 %v92
    %v179 = vunpack.c.l.b16 %v93
    %v180 = vunpack.c.l.b16 %v94
    %v181 = vunpack.c.l.b16 %v95
    %v182 = vunpack.c.l.b16 %v96
    %v183 = vunpack.c.l.b16 %v97
    %v184 = vunpack.c.l.b16 %v98
    %v185 = vpack.c.b16 %v170, %v169
    %v186 = vpack.c.b16 %v172, %v171
    %v187 = vpack.c.b16 %v174, %v173
    %v188 = vpack.c.b16 %v176, %v175
    %v189 = vpack.c.b16 %v178, %v177
    %v190 = vpack.c.b16 %v180, %v179
    %v191 = vpack.c.b16 %v182, %v181
    %v192 = vpack.c.b16 %v184, %v183
    %v233 = vunpack.c.l.b16 %v99
    %v234 = vunpack.c.h.b16 %v99
    %v235 = vunpack.c.l.b16 %v100
    %v236 = vunpack.c.h.b16 %v100
    %v237 = vunpack.c.l.b16 %v101
    %v238 = vunpack.c.h.b16 %v101
    %v239 = vunpack.c.l.b16 %v102
    %v240 = vunpack.c.h.b16 %v102
    %v241 = vunpack.c.l.b16 %v103
    %v242 = vunpack.c.h.b16 %v103
    %v243 = vunpack.c.l.b16 %v104
    %v244 = vunpack.c.h.b16 %v104
    %v245 = vunpack.c.l.b16 %v105
    %v246 = vunpack.c.h.b16 %v105
    %v247 = vunpack.c.l.b16 %v106
    %v248 = vunpack.c.h.b16 %v106
    %v249 = vunpack.c.l.b16 %v107
    %v250 = vunpack.c.h.b16 %v107
    %v251 = vunpack.c.l.b16 %v108
    %v252 = vunpack.c.h.b16 %v108
    %v253 = vunpack.c.l.b16 %v109
    %v254 = vunpack.c.h.b16 %v109
    %v255 = vunpack.c.l.b16 %v110
    %v256 = vunpack.c.h.b16 %v110
    %v257 = vunpack.c.l.b16 %v111
    %v258 = vunpack.c.h.b16 %v111
    %v259 = vunpack.c.l.b16 %v112
    %v260 = vunpack.c.h.b16 %v112
    %v261 = vunpack.c.l.b16 %v113
    %v262 = vunpack.c.h.b16 %v113
    %v263 = vunpack.c.l.b16 %v114
    %v264 = vunpack.c.h.b16 %v114
    %v265 = vunpack.c.l.b16 %v115
    %v266 = vunpack.c.h.b16 %v115
    %v267 = vunpack.c.l.b16 %v116
    %v268 = vunpack.c.h.b16 %v116
    %v269 = vunpack.c.l.b16 %v117
    %v270 = vunpack.c.h.b16 %v117
    %v271 = vunpack.c.l.b16 %v118
    %v272 = vunpack.c.h.b16 %v118
    %v273 = vunpack.c.l.b16 %v119
    %v274 = vunpack.c.h.b16 %v119
    %v275 = vunpack.c.l.b16 %v120
    %v276 = vunpack.c.h.b16 %v120
    %v277 = vunpack.c.l.b16 %v121
    %v278 = vunpack.c.h.b16 %v121
    %v279 = vunpack.c.l.b16 %v122
    %v280 = vunpack.c.h.b16 %v122
    %v281 = vunpack.c.l.b16 %v123
    %v282 = vunpack.c.h.b16 %v123
    %v283 = vunpack.c.l.b16 %v124
    %v284 = vunpack.c.h.b16 %v124
    %v285 = vunpack.c.l.b16 %v125
    %v286 = vunpack.c.h.b16 %v125
    %v287 = vunpack.c.l.b16 %v126
    %v288 = vunpack.c.h.b16 %v126
    %v289 = vunpack.c.l.b16 %v127
    %v290 = vunpack.c.h.b16 %v127
    %v291 = vunpack.c.l.b16 %v128
    %v292 = vunpack.c.h.b16 %v128
    %v293 = vunpack.c.l.b16 %v129
    %v294 = vunpack.c.h.b16 %v129
    %v295 = vunpack.c.l.b16 %v130
    %v296 = vunpack.c.h.b16 %v130
    %v297 = vpack.c.b16 %v237, %v233
    %v298 = vpack.c.b16 %v238, %v234
    %v299 = vpack.c.b16 %v239, %v235
    %v300 = vpack.c.b16 %v240, %v236
    %v301 = vpack.c.b16 %v245, %v241
    %v302 = vpack.c.b16 %v246, %v242
    %v303 = vpack.c.b16 %v247, %v243
    %v304 = vpack.c.b16 %v248, %v244
    %v305 = vpack.c.b16 %v253, %v249
    %v306 = vpack.c.b16 %v254, %v250
    %v307 = vpack.c.b16 %v255, %v251
    %v308 = vpack.c.b16 %v256, %v252
    %v309 = vpack.c.b16 %v261, %v257
    %v310 = vpack.c.b16 %v262, %v258
    %v311 = vpack.c.b16 %v263, %v259
    %v312 = vpack.c.b16 %v264, %v260
    %v313 = vpack.c.b16 %v269, %v265
    %v314 = vpack.c.b16 %v270, %v266
    %v315 = vpack.c.b16 %v271, %v267
    %v316 = vpack.c.b16 %v272, %v268
    %v317 = vpack.c.b16 %v277, %v273
    %v318 = vpack.c.b16 %v278, %v274
    %v319 = vpack.c.b16 %v279, %v275
    %v320 = vpack.c.b16 %v280, %v276
    %v321 = vpack.c.b16 %v285, %v281
    %v322 = vpack.c.b16 %v286, %v282
    %v323 = vpack.c.b16 %v287, %v283
    %v324 = vpack.c.b16 %v288, %v284
    %v325 = vpack.c.b16 %v293, %v289
    %v326 = vpack.c.b16 %v294, %v290
    %v327 = vpack.c.b16 %v295, %v291
    %v328 = vpack.c.b16 %v296, %v292
    %361 = vmatprep.subr.bf16.mxu0 %v298
    %362 = vmatpush1.bf16.msra.mxu0 %v297
    %363 = vmatprep.subr.bf16.mxu0 %v302
    %364 = vmatpush1.bf16.msra.mxu0 %v301
    %365 = vmatprep.subr.bf16.mxu0 %v306
    %366 = vmatpush1.bf16.msra.mxu0 %v305
    %367 = vmatprep.subr.bf16.mxu0 %v310
    %368 = vmatpush1.bf16.msra.mxu0 %v309
    %369 = vmatprep.subr.bf16.mxu0 %v314
    %370 = vmatpush1.bf16.msra.mxu0 %v313
    %371 = vmatprep.subr.bf16.mxu0 %v318
    %372 = vmatpush1.bf16.msra.mxu0 %v317
    %373 = vmatprep.subr.bf16.mxu0 %v322
    %374 = vmatpush1.bf16.msra.mxu0 %v321
    %375 = vmatprep.subr.bf16.mxu0 %v326
    %376 = vmatpush1.bf16.msra.mxu0 %v325
    %377 = vmatprep.subr.bf16.mxu0 0
    %378 = vmatpush1.bf16.msra.mxu0 0
    %379 = vmatprep.subr.bf16.mxu0 0
    %380 = vmatpush1.bf16.msra.mxu0 0
    %381 = vmatprep.subr.bf16.mxu0 0
    %382 = vmatpush1.bf16.msra.mxu0 0
    %383 = vmatprep.subr.bf16.mxu0 0
    %384 = vmatpush1.bf16.msra.mxu0 0
    %385 = vmatprep.subr.bf16.mxu0 0
    %386 = vmatpush1.bf16.msra.mxu0 0
    %387 = vmatprep.subr.bf16.mxu0 0
    %388 = vmatpush1.bf16.msra.mxu0 0
    %389 = vmatprep.subr.bf16.mxu0 0
    %390 = vmatpush1.bf16.msra.mxu0 0
    %391 = vmatprep.subr.bf16.mxu0 0
    %392 = vmatpush1.bf16.msra.mxu0 0
    %393 = vmatprep.mubr.bf16.mxu0 0
    %394 = vmatmul.mubr.bf16.gmra.mrb[0].mxu0 %v185
    %v395 = vpop.f32.mrb[0].mxu0
    %v396 = vadd.f32 %v136, %v395
    %v397 = vpop.f32.mrb[0].mxu0
    %v398 = vadd.f32 %v140, %v397
    %v399 = vpop.f32.mrb[0].mxu0
    %v400 = vadd.f32 %v136, %v399
    %v401 = vpop.f32.mrb[0].mxu0
    %v402 = vadd.f32 %v140, %v401
    %403 = vmatprep.mubr.bf16.mxu0 0
    %404 = vmatmul.mubr.bf16.gmra.mrb[0].mxu0 %v186
    %v405 = vpop.f32.mrb[0].mxu0
    %v406 = vadd.f32 %v136, %v405
    %v407 = vpop.f32.mrb[0].mxu0
    %v408 = vadd.f32 %v140, %v407
    %v409 = vpop.f32.mrb[0].mxu0
    %v410 = vadd.f32 %v136, %v409
    %v411 = vpop.f32.mrb[0].mxu0
    %v412 = vadd.f32 %v140, %v411
    %413 = vmatprep.mubr.bf16.mxu0 0
    %414 = vmatmul.mubr.bf16.gmra.mrb[0].mxu0 %v187
    %v415 = vpop.f32.mrb[0].mxu0
    %v416 = vadd.f32 %v136, %v415
    %v417 = vpop.f32.mrb[0].mxu0
    %v418 = vadd.f32 %v140, %v417
    %v419 = vpop.f32.mrb[0].mxu0
    %v420 = vadd.f32 %v136, %v419
    %v421 = vpop.f32.mrb[0].mxu0
    %v422 = vadd.f32 %v140, %v421
    %423 = vmatprep.mubr.bf16.mxu0 0
    %424 = vmatmul.mubr.bf16.gmra.mrb[0].mxu0 %v188
    %v425 = vpop.f32.mrb[0].mxu0
    %v426 = vadd.f32 %v136, %v425
    %v427 = vpop.f32.mrb[0].mxu0
    %v428 = vadd.f32 %v140, %v427
    %v429 = vpop.f32.mrb[0].mxu0
    %v430 = vadd.f32 %v136, %v429
    %v431 = vpop.f32.mrb[0].mxu0
    %v432 = vadd.f32 %v140, %v431
    %433 = vmatprep.mubr.bf16.mxu0 0
    %434 = vmatmul.mubr.bf16.gmra.mrb[0].mxu0 %v189
    %v435 = vpop.f32.mrb[0].mxu0
    %v436 = vadd.f32 %v136, %v435
    %v437 = vpop.f32.mrb[0].mxu0
    %v438 = vadd.f32 %v140, %v437
    %v439 = vpop.f32.mrb[0].mxu0
    %v440 = vadd.f32 %v136, %v439
    %v441 = vpop.f32.mrb[0].mxu0
    %v442 = vadd.f32 %v140, %v441
    %443 = vmatprep.mubr.bf16.mxu0 0
    %444 = vmatmul.mubr.bf16.gmra.mrb[0].mxu0 %v190
    %v445 = vpop.f32.mrb[0].mxu0
    %v446 = vadd.f32 %v136, %v445
    %v447 = vpop.f32.mrb[0].mxu0
    %v448 = vadd.f32 %v140, %v447
    %v449 = vpop.f32.mrb[0].mxu0
    %v450 = vadd.f32 %v136, %v449
    %v451 = vpop.f32.mrb[0].mxu0
    %v452 = vadd.f32 %v140, %v451
    %453 = vmatprep.mubr.bf16.mxu0 0
    %454 = vmatmul.mubr.bf16.gmra.mrb[0].mxu0 %v191
    %v455 = vpop.f32.mrb[0].mxu0
    %v456 = vadd.f32 %v136, %v455
    %v457 = vpop.f32.mrb[0].mxu0
    %v458 = vadd.f32 %v140, %v457
    %v459 = vpop.f32.mrb[0].mxu0
    %v460 = vadd.f32 %v136, %v459
    %v461 = vpop.f32.mrb[0].mxu0
    %v462 = vadd.f32 %v140, %v461
    %463 = vmatprep.mubr.bf16.mxu0 0
    %464 = vmatmul.mubr.bf16.gmra.mrb[0].mxu0 %v192
    %v465 = vpop.f32.mrb[0].mxu0
    %v466 = vadd.f32 %v136, %v465
    %v467 = vpop.f32.mrb[0].mxu0
    %v468 = vadd.f32 %v140, %v467
    %v469 = vpop.f32.mrb[0].mxu0
    %v470 = vadd.f32 %v136, %v469
    %v471 = vpop.f32.mrb[0].mxu0
    %v472 = vadd.f32 %v140, %v471
    %473 = vdwg.mxu0
    %474 = vmatprep.subr.bf16.mxu0 %v300
    %475 = vmatpush1.bf16.msra.mxu0 %v299
    %476 = vmatprep.subr.bf16.mxu0 %v304
    %477 = vmatpush1.bf16.msra.mxu0 %v303
    %478 = vmatprep.subr.bf16.mxu0 %v308
    %479 = vmatpush1.bf16.msra.mxu0 %v307
    %480 = vmatprep.subr.bf16.mxu0 %v312
    %481 = vmatpush1.bf16.msra.mxu0 %v311
    %482 = vmatprep.subr.bf16.mxu0 %v316
    %483 = vmatpush1.bf16.msra.mxu0 %v315
    %484 = vmatprep.subr.bf16.mxu0 %v320
    %485 = vmatpush1.bf16.msra.mxu0 %v319
    %486 = vmatprep.subr.bf16.mxu0 %v324
    %487 = vmatpush1.bf16.msra.mxu0 %v323
    %488 = vmatprep.subr.bf16.mxu0 %v328
    %489 = vmatpush1.bf16.msra.mxu0 %v327
    %490 = vmatprep.subr.bf16.mxu0 0
    %491 = vmatpush1.bf16.msra.mxu0 0
    %492 = vmatprep.subr.bf16.mxu0 0
    %493 = vmatpush1.bf16.msra.mxu0 0
    %494 = vmatprep.subr.bf16.mxu0 0
    %495 = vmatpush1.bf16.msra.mxu0 0
    %496 = vmatprep.subr.bf16.mxu0 0
    %497 = vmatpush1.bf16.msra.mxu0 0
    %498 = vmatprep.subr.bf16.mxu0 0
    %499 = vmatpush1.bf16.msra.mxu0 0
    %500 = vmatprep.subr.bf16.mxu0 0
    %501 = vmatpush1.bf16.msra.mxu0 0
    %502 = vmatprep.subr.bf16.mxu0 0
    %503 = vmatpush1.bf16.msra.mxu0 0
    %504 = vmatprep.subr.bf16.mxu0 0
    %505 = vmatpush1.bf16.msra.mxu0 0
    %506 = vmatprep.mubr.bf16.mxu0 0
    %507 = vmatmul.mubr.bf16.gmra.mrb[0].mxu0 %v185
    %v508 = vpop.f32.mrb[0].mxu0
    %v509 = vadd.f32 %v144, %v508
    %v510 = vpop.f32.mrb[0].mxu0
    %v511 = vadd.f32 %v148, %v510
    %v512 = vpop.f32.mrb[0].mxu0
    %v513 = vadd.f32 %v144, %v512
    %v514 = vpop.f32.mrb[0].mxu0
    %v515 = vadd.f32 %v148, %v514
    %516 = vmatprep.mubr.bf16.mxu0 0
    %517 = vmatmul.mubr.bf16.gmra.mrb[0].mxu0 %v186
    %v518 = vpop.f32.mrb[0].mxu0
    %v519 = vadd.f32 %v144, %v518
    %v520 = vpop.f32.mrb[0].mxu0
    %v521 = vadd.f32 %v148, %v520
    %v522 = vpop.f32.mrb[0].mxu0
    %v523 = vadd.f32 %v144, %v522
    %v524 = vpop.f32.mrb[0].mxu0
    %v525 = vadd.f32 %v148, %v524
    %526 = vmatprep.mubr.bf16.mxu0 0
    %527 = vmatmul.mubr.bf16.gmra.mrb[0].mxu0 %v187
    %v528 = vpop.f32.mrb[0].mxu0
    %v529 = vadd.f32 %v144, %v528
    %v530 = vpop.f32.mrb[0].mxu0
    %v531 = vadd.f32 %v148, %v530
    %v532 = vpop.f32.mrb[0].mxu0
    %v533 = vadd.f32 %v144, %v532
    %v534 = vpop.f32.mrb[0].mxu0
    %v535 = vadd.f32 %v148, %v534
    %536 = vmatprep.mubr.bf16.mxu0 0
    %537 = vmatmul.mubr.bf16.gmra.mrb[0].mxu0 %v188
    %v538 = vpop.f32.mrb[0].mxu0
    %v539 = vadd.f32 %v144, %v538
    %v540 = vpop.f32.mrb[0].mxu0
    %v541 = vadd.f32 %v148, %v540
    %v542 = vpop.f32.mrb[0].mxu0
    %v543 = vadd.f32 %v144, %v542
    %v544 = vpop.f32.mrb[0].mxu0
    %v545 = vadd.f32 %v148, %v544
    %546 = vmatprep.mubr.bf16.mxu0 0
    %547 = vmatmul.mubr.bf16.gmra.mrb[0].mxu0 %v189
    %v548 = vpop.f32.mrb[0].mxu0
    %v549 = vadd.f32 %v144, %v548
    %v550 = vpop.f32.mrb[0].mxu0
    %v551 = vadd.f32 %v148, %v550
    %v552 = vpop.f32.mrb[0].mxu0
    %v553 = vadd.f32 %v144, %v552
    %v554 = vpop.f32.mrb[0].mxu0
    %v555 = vadd.f32 %v148, %v554
    %556 = vmatprep.mubr.bf16.mxu0 0
    %557 = vmatmul.mubr.bf16.gmra.mrb[0].mxu0 %v190
    %v558 = vpop.f32.mrb[0].mxu0
    %v559 = vadd.f32 %v144, %v558
    %v560 = vpop.f32.mrb[0].mxu0
    %v561 = vadd.f32 %v148, %v560
    %v562 = vpop.f32.mrb[0].mxu0
    %v563 = vadd.f32 %v144, %v562
    %v564 = vpop.f32.mrb[0].mxu0
    %v565 = vadd.f32 %v148, %v564
    %566 = vmatprep.mubr.bf16.mxu0 0
    %567 = vmatmul.mubr.bf16.gmra.mrb[0].mxu0 %v191
    %v568 = vpop.f32.mrb[0].mxu0
    %v569 = vadd.f32 %v144, %v568
    %v570 = vpop.f32.mrb[0].mxu0
    %v571 = vadd.f32 %v148, %v570
    %v572 = vpop.f32.mrb[0].mxu0
    %v573 = vadd.f32 %v144, %v572
    %v574 = vpop.f32.mrb[0].mxu0
    %v575 = vadd.f32 %v148, %v574
    %576 = vmatprep.mubr.bf16.mxu0 0
    %577 = vmatmul.mubr.bf16.gmra.mrb[0].mxu0 %v192
    %v578 = vpop.f32.mrb[0].mxu0
    %v579 = vadd.f32 %v144, %v578
    %v580 = vpop.f32.mrb[0].mxu0
    %v581 = vadd.f32 %v148, %v580
    %v582 = vpop.f32.mrb[0].mxu0
    %v583 = vadd.f32 %v144, %v582
    %v584 = vpop.f32.mrb[0].mxu0
    %v585 = vadd.f32 %v148, %v584
    %586 = vdwg.mxu0
    %v587 = vmax.f32 %v396, 0.0
    %v588 = vmax.f32 %v398, 0.0
    %v589 = vmax.f32 %v509, 0.0
    %v590 = vmax.f32 %v511, 0.0
    %v591 = vmax.f32 %v400, 0.0
    %v592 = vmax.f32 %v402, 0.0
    %v593 = vmax.f32 %v513, 0.0
    %v594 = vmax.f32 %v515, 0.0
    %v595 = vmax.f32 %v406, 0.0
    %v596 = vmax.f32 %v408, 0.0
    %v597 = vmax.f32 %v519, 0.0
    %v598 = vmax.f32 %v521, 0.0
    %v599 = vmax.f32 %v410, 0.0
    %v600 = vmax.f32 %v412, 0.0
    %v601 = vmax.f32 %v523, 0.0
    %v602 = vmax.f32 %v525, 0.0
    %v603 = vmax.f32 %v416, 0.0
    %v604 = vmax.f32 %v418, 0.0
    %v605 = vmax.f32 %v529, 0.0
    %v606 = vmax.f32 %v531, 0.0
    %v607 = vmax.f32 %v420, 0.0
    %v608 = vmax.f32 %v422, 0.0
    %v609 = vmax.f32 %v533, 0.0
    %v610 = vmax.f32 %v535, 0.0
    %v611 = vmax.f32 %v426, 0.0
    %v612 = vmax.f32 %v428, 0.0
    %v613 = vmax.f32 %v539, 0.0
    %v614 = vmax.f32 %v541, 0.0
    %v615 = vmax.f32 %v430, 0.0
    %v616 = vmax.f32 %v432, 0.0
    %v617 = vmax.f32 %v543, 0.0
    %v618 = vmax.f32 %v545, 0.0
    %v619 = vmax.f32 %v436, 0.0
    %v620 = vmax.f32 %v438, 0.0
    %v621 = vmax.f32 %v549, 0.0
    %v622 = vmax.f32 %v551, 0.0
    %v623 = vmax.f32 %v440, 0.0
    %v624 = vmax.f32 %v442, 0.0
    %v625 = vmax.f32 %v553, 0.0
    %v626 = vmax.f32 %v555, 0.0
    %v627 = vmax.f32 %v446, 0.0
    %v628 = vmax.f32 %v448, 0.0
    %v629 = vmax.f32 %v559, 0.0
    %v630 = vmax.f32 %v561, 0.0
    %v631 = vmax.f32 %v450, 0.0
    %v632 = vmax.f32 %v452, 0.0
    %v633 = vmax.f32 %v563, 0.0
    %v634 = vmax.f32 %v565, 0.0
    %v635 = vmax.f32 %v456, 0.0
    %v636 = vmax.f32 %v458, 0.0
    %v637 = vmax.f32 %v569, 0.0
    %v638 = vmax.f32 %v571, 0.0
    %v639 = vmax.f32 %v460, 0.0
    %v640 = vmax.f32 %v462, 0.0
    %v641 = vmax.f32 %v573, 0.0
    %v642 = vmax.f32 %v575, 0.0
    %v643 = vmax.f32 %v466, 0.0
    %v644 = vmax.f32 %v468, 0.0
    %v645 = vmax.f32 %v579, 0.0
    %v646 = vmax.f32 %v581, 0.0
    %v647 = vmax.f32 %v470, 0.0
    %v648 = vmax.f32 %v472, 0.0
    %v649 = vmax.f32 %v583, 0.0
    %v650 = vmax.f32 %v585, 0.0
    %v651 = vpack.c.bf16 %v591, %v587
    %v652 = vpack.c.bf16 %v592, %v588
    %v653 = vpack.c.bf16 %v593, %v589
    %v654 = vpack.c.bf16 %v594, %v590
    %v655 = vpack.c.bf16 %v599, %v595
    %v656 = vpack.c.bf16 %v600, %v596
    %v657 = vpack.c.bf16 %v601, %v597
    %v658 = vpack.c.bf16 %v602, %v598
    %v659 = vpack.c.bf16 %v607, %v603
    %v660 = vpack.c.bf16 %v608, %v604
    %v661 = vpack.c.bf16 %v609, %v605
    %v662 = vpack.c.bf16 %v610, %v606
    %v663 = vpack.c.bf16 %v615, %v611
    %v664 = vpack.c.bf16 %v616, %v612
    %v665 = vpack.c.bf16 %v617, %v613
    %v666 = vpack.c.bf16 %v618, %v614
    %v667 = vpack.c.bf16 %v623, %v619
    %v668 = vpack.c.bf16 %v624, %v620
    %v669 = vpack.c.bf16 %v625, %v621
    %v670 = vpack.c.bf16 %v626, %v622
    %v671 = vpack.c.bf16 %v631, %v627
    %v672 = vpack.c.bf16 %v632, %v628
    %v673 = vpack.c.bf16 %v633, %v629
    %v674 = vpack.c.bf16 %v634, %v630
    %v675 = vpack.c.bf16 %v639, %v635
    %v676 = vpack.c.bf16 %v640, %v636
    %v677 = vpack.c.bf16 %v641, %v637
    %v678 = vpack.c.bf16 %v642, %v638
    %v679 = vpack.c.bf16 %v647, %v643
    %v680 = vpack.c.bf16 %v648, %v644
    %v681 = vpack.c.bf16 %v649, %v645
    %v682 = vpack.c.bf16 %v650, %v646
    %v683 = vld [vmem:[#allocation7] sm:$0xff]
    %v684 = vld [vmem:[#allocation7 + $0x8] sm:$0xff]
    %v685 = vld [vmem:[#allocation7 + $0x10] sm:$0xff]
    %v686 = vld [vmem:[#allocation7 + $0x18] sm:$0xff]
    %v687 = vld [vmem:[#allocation7 + $0x20] sm:$0xff]
    %v688 = vld [vmem:[#allocation7 + $0x28] sm:$0xff]
    %v689 = vld [vmem:[#allocation7 + $0x30] sm:$0xff]
    %v690 = vld [vmem:[#allocation7 + $0x38] sm:$0xff]
    %v691 = vld [vmem:[#allocation7 + $0x40] sm:$0xff]
    %v692 = vld [vmem:[#allocation7 + $0x48] sm:$0xff]
    %v693 = vld [vmem:[#allocation7 + $0x50] sm:$0xff]
    %v694 = vld [vmem:[#allocation7 + $0x58] sm:$0xff]
    %v695 = vld [vmem:[#allocation7 + $0x60] sm:$0xff]
    %v696 = vld [vmem:[#allocation7 + $0x68] sm:$0xff]
    %v697 = vld [vmem:[#allocation7 + $0x70] sm:$0xff]
    %v698 = vld [vmem:[#allocation7 + $0x78] sm:$0xff]
    %v699 = vld [vmem:[#allocation7 + $0x80] sm:$0xff]
    %v700 = vld [vmem:[#allocation7 + $0x88] sm:$0xff]
    %v701 = vld [vmem:[#allocation7 + $0x90] sm:$0xff]
    %v702 = vld [vmem:[#allocation7 + $0x98] sm:$0xff]
    %v703 = vld [vmem:[#allocation7 + $0xa0] sm:$0xff]
    %v704 = vld [vmem:[#allocation7 + $0xa8] sm:$0xff]
    %v705 = vld [vmem:[#allocation7 + $0xb0] sm:$0xff]
    %v706 = vld [vmem:[#allocation7 + $0xb8] sm:$0xff]
    %v707 = vld [vmem:[#allocation7 + $0xc0] sm:$0xff]
    %v708 = vld [vmem:[#allocation7 + $0xc8] sm:$0xff]
    %v709 = vld [vmem:[#allocation7 + $0xd0] sm:$0xff]
    %v710 = vld [vmem:[#allocation7 + $0xd8] sm:$0xff]
    %v711 = vld [vmem:[#allocation7 + $0xe0] sm:$0xff]
    %v712 = vld [vmem:[#allocation7 + $0xe8] sm:$0xff]
    %v713 = vld [vmem:[#allocation7 + $0xf0] sm:$0xff]
    %v714 = vld [vmem:[#allocation7 + $0xf8] sm:$0xff]
    %v715 = vld [vmem:[#allocation7 + $0x100] sm:$0xff]
    %v716 = vld [vmem:[#allocation7 + $0x108] sm:$0xff]
    %v717 = vld [vmem:[#allocation7 + $0x110] sm:$0xff]
    %v718 = vld [vmem:[#allocation7 + $0x118] sm:$0xff]
    %v719 = vld [vmem:[#allocation7 + $0x120] sm:$0xff]
    %v720 = vld [vmem:[#allocation7 + $0x128] sm:$0xff]
    %v721 = vld [vmem:[#allocation7 + $0x130] sm:$0xff]
    %v722 = vld [vmem:[#allocation7 + $0x138] sm:$0xff]
    %v723 = vld [vmem:[#allocation7 + $0x140] sm:$0xff]
    %v724 = vld [vmem:[#allocation7 + $0x148] sm:$0xff]
    %v725 = vld [vmem:[#allocation7 + $0x150] sm:$0xff]
    %v726 = vld [vmem:[#allocation7 + $0x158] sm:$0xff]
    %v727 = vld [vmem:[#allocation7 + $0x160] sm:$0xff]
    %v728 = vld [vmem:[#allocation7 + $0x168] sm:$0xff]
    %v729 = vld [vmem:[#allocation7 + $0x170] sm:$0xff]
    %v730 = vld [vmem:[#allocation7 + $0x178] sm:$0xff]
    %v731 = vld [vmem:[#allocation7 + $0x180] sm:$0xff]
    %v732 = vld [vmem:[#allocation7 + $0x188] sm:$0xff]
    %v733 = vld [vmem:[#allocation7 + $0x190] sm:$0xff]
    %v734 = vld [vmem:[#allocation7 + $0x198] sm:$0xff]
    %v735 = vld [vmem:[#allocation7 + $0x1a0] sm:$0xff]
    %v736 = vld [vmem:[#allocation7 + $0x1a8] sm:$0xff]
    %v737 = vld [vmem:[#allocation7 + $0x1b0] sm:$0xff]
    %v738 = vld [vmem:[#allocation7 + $0x1b8] sm:$0xff]
    %v739 = vld [vmem:[#allocation7 + $0x1c0] sm:$0xff]
    %v740 = vld [vmem:[#allocation7 + $0x1c8] sm:$0xff]
    %v741 = vld [vmem:[#allocation7 + $0x1d0] sm:$0xff]
    %v742 = vld [vmem:[#allocation7 + $0x1d8] sm:$0xff]
    %v743 = vld [vmem:[#allocation7 + $0x1e0] sm:$0xff]
    %v744 = vld [vmem:[#allocation7 + $0x1e8] sm:$0xff]
    %v745 = vld [vmem:[#allocation7 + $0x1f0] sm:$0xff]
    %v746 = vld [vmem:[#allocation7 + $0x1f8] sm:$0xff]
    %v747 = vld [vmem:[#allocation7 + $0x200] sm:$0xff]
    %v748 = vld [vmem:[#allocation7 + $0x208] sm:$0xff]
    %v749 = vld [vmem:[#allocation7 + $0x210] sm:$0xff]
    %v750 = vld [vmem:[#allocation7 + $0x218] sm:$0xff]
    %v751 = vld [vmem:[#allocation7 + $0x220] sm:$0xff]
    %v752 = vld [vmem:[#allocation7 + $0x228] sm:$0xff]
    %v753 = vld [vmem:[#allocation7 + $0x230] sm:$0xff]
    %v754 = vld [vmem:[#allocation7 + $0x238] sm:$0xff]
    %v755 = vld [vmem:[#allocation7 + $0x240] sm:$0xff]
    %v756 = vld [vmem:[#allocation7 + $0x248] sm:$0xff]
    %v757 = vld [vmem:[#allocation7 + $0x250] sm:$0xff]
    %v758 = vld [vmem:[#allocation7 + $0x258] sm:$0xff]
    %v759 = vld [vmem:[#allocation7 + $0x260] sm:$0xff]
    %v760 = vld [vmem:[#allocation7 + $0x268] sm:$0xff]
    %v761 = vld [vmem:[#allocation7 + $0x270] sm:$0xff]
    %v762 = vld [vmem:[#allocation7 + $0x278] sm:$0xff]
    %v763 = vld [vmem:[#allocation7 + $0x280] sm:$0xff]
    %v764 = vld [vmem:[#allocation7 + $0x288] sm:$0xff]
    %v765 = vld [vmem:[#allocation7 + $0x290] sm:$0xff]
    %v766 = vld [vmem:[#allocation7 + $0x298] sm:$0xff]
    %v767 = vld [vmem:[#allocation7 + $0x2a0] sm:$0xff]
    %v768 = vld [vmem:[#allocation7 + $0x2a8] sm:$0xff]
    %v769 = vld [vmem:[#allocation7 + $0x2b0] sm:$0xff]
    %v770 = vld [vmem:[#allocation7 + $0x2b8] sm:$0xff]
    %v771 = vld [vmem:[#allocation7 + $0x2c0] sm:$0xff]
    %v772 = vld [vmem:[#allocation7 + $0x2c8] sm:$0xff]
    %v773 = vld [vmem:[#allocation7 + $0x2d0] sm:$0xff]
    %v774 = vld [vmem:[#allocation7 + $0x2d8] sm:$0xff]
    %v775 = vld [vmem:[#allocation7 + $0x2e0] sm:$0xff]
    %v776 = vld [vmem:[#allocation7 + $0x2e8] sm:$0xff]
    %v777 = vld [vmem:[#allocation7 + $0x2f0] sm:$0xff]
    %v778 = vld [vmem:[#allocation7 + $0x2f8] sm:$0xff]
    %v779 = vld [vmem:[#allocation7 + $0x300] sm:$0xff]
    %v780 = vld [vmem:[#allocation7 + $0x308] sm:$0xff]
    %v781 = vld [vmem:[#allocation7 + $0x310] sm:$0xff]
    %v782 = vld [vmem:[#allocation7 + $0x318] sm:$0xff]
    %v783 = vld [vmem:[#allocation7 + $0x320] sm:$0xff]
    %v784 = vld [vmem:[#allocation7 + $0x328] sm:$0xff]
    %v785 = vld [vmem:[#allocation7 + $0x330] sm:$0xff]
    %v786 = vld [vmem:[#allocation7 + $0x338] sm:$0xff]
    %v787 = vld [vmem:[#allocation7 + $0x340] sm:$0xff]
    %v788 = vld [vmem:[#allocation7 + $0x348] sm:$0xff]
    %v789 = vld [vmem:[#allocation7 + $0x350] sm:$0xff]
    %v790 = vld [vmem:[#allocation7 + $0x358] sm:$0xff]
    %v791 = vld [vmem:[#allocation7 + $0x360] sm:$0xff]
    %v792 = vld [vmem:[#allocation7 + $0x368] sm:$0xff]
    %v793 = vld [vmem:[#allocation7 + $0x370] sm:$0xff]
    %v794 = vld [vmem:[#allocation7 + $0x378] sm:$0xff]
    %v795 = vld [vmem:[#allocation7 + $0x380] sm:$0xff]
    %v796 = vld [vmem:[#allocation7 + $0x388] sm:$0xff]
    %v797 = vld [vmem:[#allocation7 + $0x390] sm:$0xff]
    %v798 = vld [vmem:[#allocation7 + $0x398] sm:$0xff]
    %v799 = vld [vmem:[#allocation7 + $0x3a0] sm:$0xff]
    %v800 = vld [vmem:[#allocation7 + $0x3a8] sm:$0xff]
    %v801 = vld [vmem:[#allocation7 + $0x3b0] sm:$0xff]
    %v802 = vld [vmem:[#allocation7 + $0x3b8] sm:$0xff]
    %v803 = vld [vmem:[#allocation7 + $0x3c0] sm:$0xff]
    %v804 = vld [vmem:[#allocation7 + $0x3c8] sm:$0xff]
    %v805 = vld [vmem:[#allocation7 + $0x3d0] sm:$0xff]
    %v806 = vld [vmem:[#allocation7 + $0x3d8] sm:$0xff]
    %v807 = vld [vmem:[#allocation7 + $0x3e0] sm:$0xff]
    %v808 = vld [vmem:[#allocation7 + $0x3e8] sm:$0xff]
    %v809 = vld [vmem:[#allocation7 + $0x3f0] sm:$0xff]
    %v810 = vld [vmem:[#allocation7 + $0x3f8] sm:$0xff]
    %v811 = vld [vmem:[%s4] sm:$0xf]
    %v813 = vlaneseq
    %v814 = vshrl.u32 %v813, 7
    %v815 = vsub.s32 0, %v814
    %v816 = vrot.slane %v811, %v815
    %v817 = vlaneseq
    %v818 = vshrl.u32 %v817, 7
    %v819 = vsub.s32 1, %v818
    %v820 = vrot.slane %v811, %v819
    %v821 = vlaneseq
    %v822 = vshrl.u32 %v821, 7
    %v823 = vsub.s32 2, %v822
    %v824 = vrot.slane %v811, %v823
    %v825 = vlaneseq
    %v826 = vshrl.u32 %v825, 7
    %v827 = vsub.s32 3, %v826
    %v828 = vrot.slane %v811, %v827
    %v961 = vunpack.c.l.b16 %v683
    %v962 = vunpack.c.h.b16 %v683
    %v963 = vunpack.c.l.b16 %v684
    %v964 = vunpack.c.h.b16 %v684
    %v965 = vunpack.c.l.b16 %v685
    %v966 = vunpack.c.h.b16 %v685
    %v967 = vunpack.c.l.b16 %v686
    %v968 = vunpack.c.h.b16 %v686
    %v969 = vunpack.c.l.b16 %v687
    %v970 = vunpack.c.h.b16 %v687
    %v971 = vunpack.c.l.b16 %v688
    %v972 = vunpack.c.h.b16 %v688
    %v973 = vunpack.c.l.b16 %v689
    %v974 = vunpack.c.h.b16 %v689
    %v975 = vunpack.c.l.b16 %v690
    %v976 = vunpack.c.h.b16 %v690
    %v977 = vunpack.c.l.b16 %v691
    %v978 = vunpack.c.h.b16 %v691
    %v979 = vunpack.c.l.b16 %v692
    %v980 = vunpack.c.h.b16 %v692
    %v981 = vunpack.c.l.b16 %v693
    %v982 = vunpack.c.h.b16 %v693
    %v983 = vunpack.c.l.b16 %v694
    %v984 = vunpack.c.h.b16 %v694
    %v985 = vunpack.c.l.b16 %v695
    %v986 = vunpack.c.h.b16 %v695
    %v987 = vunpack.c.l.b16 %v696
    %v988 = vunpack.c.h.b16 %v696
    %v989 = vunpack.c.l.b16 %v697
    %v990 = vunpack.c.h.b16 %v697
    %v991 = vunpack.c.l.b16 %v698
    %v992 = vunpack.c.h.b16 %v698
    %v993 = vunpack.c.l.b16 %v699
    %v994 = vunpack.c.h.b16 %v699
    %v995 = vunpack.c.l.b16 %v700
    %v996 = vunpack.c.h.b16 %v700
    %v997 = vunpack.c.l.b16 %v701
    %v998 = vunpack.c.h.b16 %v701
    %v999 = vunpack.c.l.b16 %v702
    %v1000 = vunpack.c.h.b16 %v702
    %v1001 = vunpack.c.l.b16 %v703
    %v1002 = vunpack.c.h.b16 %v703
    %v1003 = vunpack.c.l.b16 %v704
    %v1004 = vunpack.c.h.b16 %v704
    %v1005 = vunpack.c.l.b16 %v705
    %v1006 = vunpack.c.h.b16 %v705
    %v1007 = vunpack.c.l.b16 %v706
    %v1008 = vunpack.c.h.b16 %v706
    %v1009 = vunpack.c.l.b16 %v707
    %v1010 = vunpack.c.h.b16 %v707
    %v1011 = vunpack.c.l.b16 %v708
    %v1012 = vunpack.c.h.b16 %v708
    %v1013 = vunpack.c.l.b16 %v709
    %v1014 = vunpack.c.h.b16 %v709
    %v1015 = vunpack.c.l.b16 %v710
    %v1016 = vunpack.c.h.b16 %v710
    %v1017 = vunpack.c.l.b16 %v711
    %v1018 = vunpack.c.h.b16 %v711
    %v1019 = vunpack.c.l.b16 %v712
    %v1020 = vunpack.c.h.b16 %v712
    %v1021 = vunpack.c.l.b16 %v713
    %v1022 = vunpack.c.h.b16 %v713
    %v1023 = vunpack.c.l.b16 %v714
    %v1024 = vunpack.c.h.b16 %v714
    %v1025 = vunpack.c.l.b16 %v715
    %v1026 = vunpack.c.h.b16 %v715
    %v1027 = vunpack.c.l.b16 %v716
    %v1028 = vunpack.c.h.b16 %v716
    %v1029 = vunpack.c.l.b16 %v717
    %v1030 = vunpack.c.h.b16 %v717
    %v1031 = vunpack.c.l.b16 %v718
    %v1032 = vunpack.c.h.b16 %v718
    %v1033 = vunpack.c.l.b16 %v719
    %v1034 = vunpack.c.h.b16 %v719
    %v1035 = vunpack.c.l.b16 %v720
    %v1036 = vunpack.c.h.b16 %v720
    %v1037 = vunpack.c.l.b16 %v721
    %v1038 = vunpack.c.h.b16 %v721
    %v1039 = vunpack.c.l.b16 %v722
    %v1040 = vunpack.c.h.b16 %v722
    %v1041 = vunpack.c.l.b16 %v723
    %v1042 = vunpack.c.h.b16 %v723
    %v1043 = vunpack.c.l.b16 %v724
    %v1044 = vunpack.c.h.b16 %v724
    %v1045 = vunpack.c.l.b16 %v725
    %v1046 = vunpack.c.h.b16 %v725
    %v1047 = vunpack.c.l.b16 %v726
    %v1048 = vunpack.c.h.b16 %v726
    %v1049 = vunpack.c.l.b16 %v727
    %v1050 = vunpack.c.h.b16 %v727
    %v1051 = vunpack.c.l.b16 %v728
    %v1052 = vunpack.c.h.b16 %v728
    %v1053 = vunpack.c.l.b16 %v729
    %v1054 = vunpack.c.h.b16 %v729
    %v1055 = vunpack.c.l.b16 %v730
    %v1056 = vunpack.c.h.b16 %v730
    %v1057 = vunpack.c.l.b16 %v731
    %v1058 = vunpack.c.h.b16 %v731
    %v1059 = vunpack.c.l.b16 %v732
    %v1060 = vunpack.c.h.b16 %v732
    %v1061 = vunpack.c.l.b16 %v733
    %v1062 = vunpack.c.h.b16 %v733
    %v1063 = vunpack.c.l.b16 %v734
    %v1064 = vunpack.c.h.b16 %v734
    %v1065 = vunpack.c.l.b16 %v735
    %v1066 = vunpack.c.h.b16 %v735
    %v1067 = vunpack.c.l.b16 %v736
    %v1068 = vunpack.c.h.b16 %v736
    %v1069 = vunpack.c.l.b16 %v737
    %v1070 = vunpack.c.h.b16 %v737
    %v1071 = vunpack.c.l.b16 %v738
    %v1072 = vunpack.c.h.b16 %v738
    %v1073 = vunpack.c.l.b16 %v739
    %v1074 = vunpack.c.h.b16 %v739
    %v1075 = vunpack.c.l.b16 %v740
    %v1076 = vunpack.c.h.b16 %v740
    %v1077 = vunpack.c.l.b16 %v741
    %v1078 = vunpack.c.h.b16 %v741
    %v1079 = vunpack.c.l.b16 %v742
    %v1080 = vunpack.c.h.b16 %v742
    %v1081 = vunpack.c.l.b16 %v743
    %v1082 = vunpack.c.h.b16 %v743
    %v1083 = vunpack.c.l.b16 %v744
    %v1084 = vunpack.c.h.b16 %v744
    %v1085 = vunpack.c.l.b16 %v745
    %v1086 = vunpack.c.h.b16 %v745
    %v1087 = vunpack.c.l.b16 %v746
    %v1088 = vunpack.c.h.b16 %v746
    %v1089 = vunpack.c.l.b16 %v747
    %v1090 = vunpack.c.h.b16 %v747
    %v1091 = vunpack.c.l.b16 %v748
    %v1092 = vunpack.c.h.b16 %v748
    %v1093 = vunpack.c.l.b16 %v749
    %v1094 = vunpack.c.h.b16 %v749
    %v1095 = vunpack.c.l.b16 %v750
    %v1096 = vunpack.c.h.b16 %v750
    %v1097 = vunpack.c.l.b16 %v751
    %v1098 = vunpack.c.h.b16 %v751
    %v1099 = vunpack.c.l.b16 %v752
    %v1100 = vunpack.c.h.b16 %v752
    %v1101 = vunpack.c.l.b16 %v753
    %v1102 = vunpack.c.h.b16 %v753
    %v1103 = vunpack.c.l.b16 %v754
    %v1104 = vunpack.c.h.b16 %v754
    %v1105 = vunpack.c.l.b16 %v755
    %v1106 = vunpack.c.h.b16 %v755
    %v1107 = vunpack.c.l.b16 %v756
    %v1108 = vunpack.c.h.b16 %v756
    %v1109 = vunpack.c.l.b16 %v757
    %v1110 = vunpack.c.h.b16 %v757
    %v1111 = vunpack.c.l.b16 %v758
    %v1112 = vunpack.c.h.b16 %v758
    %v1113 = vunpack.c.l.b16 %v759
    %v1114 = vunpack.c.h.b16 %v759
    %v1115 = vunpack.c.l.b16 %v760
    %v1116 = vunpack.c.h.b16 %v760
    %v1117 = vunpack.c.l.b16 %v761
    %v1118 = vunpack.c.h.b16 %v761
    %v1119 = vunpack.c.l.b16 %v762
    %v1120 = vunpack.c.h.b16 %v762
    %v1121 = vunpack.c.l.b16 %v763
    %v1122 = vunpack.c.h.b16 %v763
    %v1123 = vunpack.c.l.b16 %v764
    %v1124 = vunpack.c.h.b16 %v764
    %v1125 = vunpack.c.l.b16 %v765
    %v1126 = vunpack.c.h.b16 %v765
    %v1127 = vunpack.c.l.b16 %v766
    %v1128 = vunpack.c.h.b16 %v766
    %v1129 = vunpack.c.l.b16 %v767
    %v1130 = vunpack.c.h.b16 %v767
    %v1131 = vunpack.c.l.b16 %v768
    %v1132 = vunpack.c.h.b16 %v768
    %v1133 = vunpack.c.l.b16 %v769
    %v1134 = vunpack.c.h.b16 %v769
    %v1135 = vunpack.c.l.b16 %v770
    %v1136 = vunpack.c.h.b16 %v770
    %v1137 = vunpack.c.l.b16 %v771
    %v1138 = vunpack.c.h.b16 %v771
    %v1139 = vunpack.c.l.b16 %v772
    %v1140 = vunpack.c.h.b16 %v772
    %v1141 = vunpack.c.l.b16 %v773
    %v1142 = vunpack.c.h.b16 %v773
    %v1143 = vunpack.c.l.b16 %v774
    %v1144 = vunpack.c.h.b16 %v774
    %v1145 = vunpack.c.l.b16 %v775
    %v1146 = vunpack.c.h.b16 %v775
    %v1147 = vunpack.c.l.b16 %v776
    %v1148 = vunpack.c.h.b16 %v776
    %v1149 = vunpack.c.l.b16 %v777
    %v1150 = vunpack.c.h.b16 %v777
    %v1151 = vunpack.c.l.b16 %v778
    %v1152 = vunpack.c.h.b16 %v778
    %v1153 = vunpack.c.l.b16 %v779
    %v1154 = vunpack.c.h.b16 %v779
    %v1155 = vunpack.c.l.b16 %v780
    %v1156 = vunpack.c.h.b16 %v780
    %v1157 = vunpack.c.l.b16 %v781
    %v1158 = vunpack.c.h.b16 %v781
    %v1159 = vunpack.c.l.b16 %v782
    %v1160 = vunpack.c.h.b16 %v782
    %v1161 = vunpack.c.l.b16 %v783
    %v1162 = vunpack.c.h.b16 %v783
    %v1163 = vunpack.c.l.b16 %v784
    %v1164 = vunpack.c.h.b16 %v784
    %v1165 = vunpack.c.l.b16 %v785
    %v1166 = vunpack.c.h.b16 %v785
    %v1167 = vunpack.c.l.b16 %v786
    %v1168 = vunpack.c.h.b16 %v786
    %v1169 = vunpack.c.l.b16 %v787
    %v1170 = vunpack.c.h.b16 %v787
    %v1171 = vunpack.c.l.b16 %v788
    %v1172 = vunpack.c.h.b16 %v788
    %v1173 = vunpack.c.l.b16 %v789
    %v1174 = vunpack.c.h.b16 %v789
    %v1175 = vunpack.c.l.b16 %v790
    %v1176 = vunpack.c.h.b16 %v790
    %v1177 = vunpack.c.l.b16 %v791
    %v1178 = vunpack.c.h.b16 %v791
    %v1179 = vunpack.c.l.b16 %v792
    %v1180 = vunpack.c.h.b16 %v792
    %v1181 = vunpack.c.l.b16 %v793
    %v1182 = vunpack.c.h.b16 %v793
    %v1183 = vunpack.c.l.b16 %v794
    %v1184 = vunpack.c.h.b16 %v794
    %v1185 = vunpack.c.l.b16 %v795
    %v1186 = vunpack.c.h.b16 %v795
    %v1187 = vunpack.c.l.b16 %v796
    %v1188 = vunpack.c.h.b16 %v796
    %v1189 = vunpack.c.l.b16 %v797
    %v1190 = vunpack.c.h.b16 %v797
    %v1191 = vunpack.c.l.b16 %v798
    %v1192 = vunpack.c.h.b16 %v798
    %v1193 = vunpack.c.l.b16 %v799
    %v1194 = vunpack.c.h.b16 %v799
    %v1195 = vunpack.c.l.b16 %v800
    %v1196 = vunpack.c.h.b16 %v800
    %v1197 = vunpack.c.l.b16 %v801
    %v1198 = vunpack.c.h.b16 %v801
    %v1199 = vunpack.c.l.b16 %v802
    %v1200 = vunpack.c.h.b16 %v802
    %v1201 = vunpack.c.l.b16 %v803
    %v1202 = vunpack.c.h.b16 %v803
    %v1203 = vunpack.c.l.b16 %v804
    %v1204 = vunpack.c.h.b16 %v804
    %v1205 = vunpack.c.l.b16 %v805
    %v1206 = vunpack.c.h.b16 %v805
    %v1207 = vunpack.c.l.b16 %v806
    %v1208 = vunpack.c.h.b16 %v806
    %v1209 = vunpack.c.l.b16 %v807
    %v1210 = vunpack.c.h.b16 %v807
    %v1211 = vunpack.c.l.b16 %v808
    %v1212 = vunpack.c.h.b16 %v808
    %v1213 = vunpack.c.l.b16 %v809
    %v1214 = vunpack.c.h.b16 %v809
    %v1215 = vunpack.c.l.b16 %v810
    %v1216 = vunpack.c.h.b16 %v810
    %v1217 = vpack.c.b16 %v965, %v961
    %v1218 = vpack.c.b16 %v966, %v962
    %v1219 = vpack.c.b16 %v967, %v963
    %v1220 = vpack.c.b16 %v968, %v964
    %v1221 = vpack.c.b16 %v973, %v969
    %v1222 = vpack.c.b16 %v974, %v970
    %v1223 = vpack.c.b16 %v975, %v971
    %v1224 = vpack.c.b16 %v976, %v972
    %v1225 = vpack.c.b16 %v981, %v977
    %v1226 = vpack.c.b16 %v982, %v978
    %v1227 = vpack.c.b16 %v983, %v979
    %v1228 = vpack.c.b16 %v984, %v980
    %v1229 = vpack.c.b16 %v989, %v985
    %v1230 = vpack.c.b16 %v990, %v986
    %v1231 = vpack.c.b16 %v991, %v987
    %v1232 = vpack.c.b16 %v992, %v988
    %v1233 = vpack.c.b16 %v997, %v993
    %v1234 = vpack.c.b16 %v998, %v994
    %v1235 = vpack.c.b16 %v999, %v995
    %v1236 = vpack.c.b16 %v1000, %v996
    %v1237 = vpack.c.b16 %v1005, %v1001
    %v1238 = vpack.c.b16 %v1006, %v1002
    %v1239 = vpack.c.b16 %v1007, %v1003
    %v1240 = vpack.c.b16 %v1008, %v1004
    %v1241 = vpack.c.b16 %v1013, %v1009
    %v1242 = vpack.c.b16 %v1014, %v1010
    %v1243 = vpack.c.b16 %v1015, %v1011
    %v1244 = vpack.c.b16 %v1016, %v1012
    %v1245 = vpack.c.b16 %v1021, %v1017
    %v1246 = vpack.c.b16 %v1022, %v1018
    %v1247 = vpack.c.b16 %v1023, %v1019
    %v1248 = vpack.c.b16 %v1024, %v1020
    %v1249 = vpack.c.b16 %v1029, %v1025
    %v1250 = vpack.c.b16 %v1030, %v1026
    %v1251 = vpack.c.b16 %v1031, %v1027
    %v1252 = vpack.c.b16 %v1032, %v1028
    %v1253 = vpack.c.b16 %v1037, %v1033
    %v1254 = vpack.c.b16 %v1038, %v1034
    %v1255 = vpack.c.b16 %v1039, %v1035
    %v1256 = vpack.c.b16 %v1040, %v1036
    %v1257 = vpack.c.b16 %v1045, %v1041
    %v1258 = vpack.c.b16 %v1046, %v1042
    %v1259 = vpack.c.b16 %v1047, %v1043
    %v1260 = vpack.c.b16 %v1048, %v1044
    %v1261 = vpack.c.b16 %v1053, %v1049
    %v1262 = vpack.c.b16 %v1054, %v1050
    %v1263 = vpack.c.b16 %v1055, %v1051
    %v1264 = vpack.c.b16 %v1056, %v1052
    %v1265 = vpack.c.b16 %v1061, %v1057
    %v1266 = vpack.c.b16 %v1062, %v1058
    %v1267 = vpack.c.b16 %v1063, %v1059
    %v1268 = vpack.c.b16 %v1064, %v1060
    %v1269 = vpack.c.b16 %v1069, %v1065
    %v1270 = vpack.c.b16 %v1070, %v1066
    %v1271 = vpack.c.b16 %v1071, %v1067
    %v1272 = vpack.c.b16 %v1072, %v1068
    %v1273 = vpack.c.b16 %v1077, %v1073
    %v1274 = vpack.c.b16 %v1078, %v1074
    %v1275 = vpack.c.b16 %v1079, %v1075
    %v1276 = vpack.c.b16 %v1080, %v1076
    %v1277 = vpack.c.b16 %v1085, %v1081
    %v1278 = vpack.c.b16 %v1086, %v1082
    %v1279 = vpack.c.b16 %v1087, %v1083
    %v1280 = vpack.c.b16 %v1088, %v1084
    %v1281 = vpack.c.b16 %v1093, %v1089
    %v1282 = vpack.c.b16 %v1094, %v1090
    %v1283 = vpack.c.b16 %v1095, %v1091
    %v1284 = vpack.c.b16 %v1096, %v1092
    %v1285 = vpack.c.b16 %v1101, %v1097
    %v1286 = vpack.c.b16 %v1102, %v1098
    %v1287 = vpack.c.b16 %v1103, %v1099
    %v1288 = vpack.c.b16 %v1104, %v1100
    %v1289 = vpack.c.b16 %v1109, %v1105
    %v1290 = vpack.c.b16 %v1110, %v1106
    %v1291 = vpack.c.b16 %v1111, %v1107
    %v1292 = vpack.c.b16 %v1112, %v1108
    %v1293 = vpack.c.b16 %v1117, %v1113
    %v1294 = vpack.c.b16 %v1118, %v1114
    %v1295 = vpack.c.b16 %v1119, %v1115
    %v1296 = vpack.c.b16 %v1120, %v1116
    %v1297 = vpack.c.b16 %v1125, %v1121
    %v1298 = vpack.c.b16 %v1126, %v1122
    %v1299 = vpack.c.b16 %v1127, %v1123
    %v1300 = vpack.c.b16 %v1128, %v1124
    %v1301 = vpack.c.b16 %v1133, %v1129
    %v1302 = vpack.c.b16 %v1134, %v1130
    %v1303 = vpack.c.b16 %v1135, %v1131
    %v1304 = vpack.c.b16 %v1136, %v1132
    %v1305 = vpack.c.b16 %v1141, %v1137
    %v1306 = vpack.c.b16 %v1142, %v1138
    %v1307 = vpack.c.b16 %v1143, %v1139
    %v1308 = vpack.c.b16 %v1144, %v1140
    %v1309 = vpack.c.b16 %v1149, %v1145
    %v1310 = vpack.c.b16 %v1150, %v1146
    %v1311 = vpack.c.b16 %v1151, %v1147
    %v1312 = vpack.c.b16 %v1152, %v1148
    %v1313 = vpack.c.b16 %v1157, %v1153
    %v1314 = vpack.c.b16 %v1158, %v1154
    %v1315 = vpack.c.b16 %v1159, %v1155
    %v1316 = vpack.c.b16 %v1160, %v1156
    %v1317 = vpack.c.b16 %v1165, %v1161
    %v1318 = vpack.c.b16 %v1166, %v1162
    %v1319 = vpack.c.b16 %v1167, %v1163
    %v1320 = vpack.c.b16 %v1168, %v1164
    %v1321 = vpack.c.b16 %v1173, %v1169
    %v1322 = vpack.c.b16 %v1174, %v1170
    %v1323 = vpack.c.b16 %v1175, %v1171
    %v1324 = vpack.c.b16 %v1176, %v1172
    %v1325 = vpack.c.b16 %v1181, %v1177
    %v1326 = vpack.c.b16 %v1182, %v1178
    %v1327 = vpack.c.b16 %v1183, %v1179
    %v1328 = vpack.c.b16 %v1184, %v1180
    %v1329 = vpack.c.b16 %v1189, %v1185
    %v1330 = vpack.c.b16 %v1190, %v1186
    %v1331 = vpack.c.b16 %v1191, %v1187
    %v1332 = vpack.c.b16 %v1192, %v1188
    %v1333 = vpack.c.b16 %v1197, %v1193
    %v1334 = vpack.c.b16 %v1198, %v1194
    %v1335 = vpack.c.b16 %v1199, %v1195
    %v1336 = vpack.c.b16 %v1200, %v1196
    %v1337 = vpack.c.b16 %v1205, %v1201
    %v1338 = vpack.c.b16 %v1206, %v1202
    %v1339 = vpack.c.b16 %v1207, %v1203
    %v1340 = vpack.c.b16 %v1208, %v1204
    %v1341 = vpack.c.b16 %v1213, %v1209
    %v1342 = vpack.c.b16 %v1214, %v1210
    %v1343 = vpack.c.b16 %v1215, %v1211
    %v1344 = vpack.c.b16 %v1216, %v1212
    %1473 = vmatprep.subr.bf16.mxu0 %v1218
    %1474 = vmatpush1.bf16.msra.mxu0 %v1217
    %1475 = vmatprep.subr.bf16.mxu0 %v1222
    %1476 = vmatpush1.bf16.msra.mxu0 %v1221
    %1477 = vmatprep.subr.bf16.mxu0 %v1226
    %1478 = vmatpush1.bf16.msra.mxu0 %v1225
    %1479 = vmatprep.subr.bf16.mxu0 %v1230
    %1480 = vmatpush1.bf16.msra.mxu0 %v1229
    %1481 = vmatprep.subr.bf16.mxu0 %v1234
    %1482 = vmatpush1.bf16.msra.mxu0 %v1233
    %1483 = vmatprep.subr.bf16.mxu0 %v1238
    %1484 = vmatpush1.bf16.msra.mxu0 %v1237
    %1485 = vmatprep.subr.bf16.mxu0 %v1242
    %1486 = vmatpush1.bf16.msra.mxu0 %v1241
    %1487 = vmatprep.subr.bf16.mxu0 %v1246
    %1488 = vmatpush1.bf16.msra.mxu0 %v1245
    %1489 = vmatprep.subr.bf16.mxu0 %v1250
    %1490 = vmatpush1.bf16.msra.mxu0 %v1249
    %1491 = vmatprep.subr.bf16.mxu0 %v1254
    %1492 = vmatpush1.bf16.msra.mxu0 %v1253
    %1493 = vmatprep.subr.bf16.mxu0 %v1258
    %1494 = vmatpush1.bf16.msra.mxu0 %v1257
    %1495 = vmatprep.subr.bf16.mxu0 %v1262
    %1496 = vmatpush1.bf16.msra.mxu0 %v1261
    %1497 = vmatprep.subr.bf16.mxu0 %v1266
    %1498 = vmatpush1.bf16.msra.mxu0 %v1265
    %1499 = vmatprep.subr.bf16.mxu0 %v1270
    %1500 = vmatpush1.bf16.msra.mxu0 %v1269
    %1501 = vmatprep.subr.bf16.mxu0 %v1274
    %1502 = vmatpush1.bf16.msra.mxu0 %v1273
    %1503 = vmatprep.subr.bf16.mxu0 %v1278
    %1504 = vmatpush1.bf16.msra.mxu0 %v1277
    %1505 = vmatprep.mubr.bf16.mxu0 %v652
    %1506 = vmatmul.mubr.bf16.gmra.mrb[0].mxu0 %v651
    %v1507 = vpop.f32.mrb[0].mxu0
    %v1508 = vadd.f32 %v816, %v1507
    %v1509 = vpop.f32.mrb[0].mxu0
    %v1510 = vadd.f32 %v820, %v1509
    %v1511 = vpop.f32.mrb[0].mxu0
    %v1512 = vadd.f32 %v816, %v1511
    %v1513 = vpop.f32.mrb[0].mxu0
    %v1514 = vadd.f32 %v820, %v1513
    %1515 = vmatprep.mubr.bf16.mxu0 %v656
    %1516 = vmatmul.mubr.bf16.gmra.mrb[0].mxu0 %v655
    %v1517 = vpop.f32.mrb[0].mxu0
    %v1518 = vadd.f32 %v816, %v1517
    %v1519 = vpop.f32.mrb[0].mxu0
    %v1520 = vadd.f32 %v820, %v1519
    %v1521 = vpop.f32.mrb[0].mxu0
    %v1522 = vadd.f32 %v816, %v1521
    %v1523 = vpop.f32.mrb[0].mxu0
    %v1524 = vadd.f32 %v820, %v1523
    %1525 = vmatprep.mubr.bf16.mxu0 %v660
    %1526 = vmatmul.mubr.bf16.gmra.mrb[0].mxu0 %v659
    %v1527 = vpop.f32.mrb[0].mxu0
    %v1528 = vadd.f32 %v816, %v1527
    %v1529 = vpop.f32.mrb[0].mxu0
    %v1530 = vadd.f32 %v820, %v1529
    %v1531 = vpop.f32.mrb[0].mxu0
    %v1532 = vadd.f32 %v816, %v1531
    %v1533 = vpop.f32.mrb[0].mxu0
    %v1534 = vadd.f32 %v820, %v1533
    %1535 = vmatprep.mubr.bf16.mxu0 %v664
    %1536 = vmatmul.mubr.bf16.gmra.mrb[0].mxu0 %v663
    %v1537 = vpop.f32.mrb[0].mxu0
    %v1538 = vadd.f32 %v816, %v1537
    %v1539 = vpop.f32.mrb[0].mxu0
    %v1540 = vadd.f32 %v820, %v1539
    %v1541 = vpop.f32.mrb[0].mxu0
    %v1542 = vadd.f32 %v816, %v1541
    %v1543 = vpop.f32.mrb[0].mxu0
    %v1544 = vadd.f32 %v820, %v1543
    %1545 = vmatprep.mubr.bf16.mxu0 %v668
    %1546 = vmatmul.mubr.bf16.gmra.mrb[0].mxu0 %v667
    %v1547 = vpop.f32.mrb[0].mxu0
    %v1548 = vadd.f32 %v816, %v1547
    %v1549 = vpop.f32.mrb[0].mxu0
    %v1550 = vadd.f32 %v820, %v1549
    %v1551 = vpop.f32.mrb[0].mxu0
    %v1552 = vadd.f32 %v816, %v1551
    %v1553 = vpop.f32.mrb[0].mxu0
    %v1554 = vadd.f32 %v820, %v1553
    %1555 = vmatprep.mubr.bf16.mxu0 %v672
    %1556 = vmatmul.mubr.bf16.gmra.mrb[0].mxu0 %v671
    %v1557 = vpop.f32.mrb[0].mxu0
    %v1558 = vadd.f32 %v816, %v1557
    %v1559 = vpop.f32.mrb[0].mxu0
    %v1560 = vadd.f32 %v820, %v1559
    %v1561 = vpop.f32.mrb[0].mxu0
    %v1562 = vadd.f32 %v816, %v1561
    %v1563 = vpop.f32.mrb[0].mxu0
    %v1564 = vadd.f32 %v820, %v1563
    %1565 = vmatprep.mubr.bf16.mxu0 %v676
    %1566 = vmatmul.mubr.bf16.gmra.mrb[0].mxu0 %v675
    %v1567 = vpop.f32.mrb[0].mxu0
    %v1568 = vadd.f32 %v816, %v1567
    %v1569 = vpop.f32.mrb[0].mxu0
    %v1570 = vadd.f32 %v820, %v1569
    %v1571 = vpop.f32.mrb[0].mxu0
    %v1572 = vadd.f32 %v816, %v1571
    %v1573 = vpop.f32.mrb[0].mxu0
    %v1574 = vadd.f32 %v820, %v1573
    %1575 = vmatprep.mubr.bf16.mxu0 %v680
    %1576 = vmatmul.mubr.bf16.gmra.mrb[0].mxu0 %v679
    %v1577 = vpop.f32.mrb[0].mxu0
    %v1578 = vadd.f32 %v816, %v1577
    %v1579 = vpop.f32.mrb[0].mxu0
    %v1580 = vadd.f32 %v820, %v1579
    %v1581 = vpop.f32.mrb[0].mxu0
    %v1582 = vadd.f32 %v816, %v1581
    %v1583 = vpop.f32.mrb[0].mxu0
    %v1584 = vadd.f32 %v820, %v1583
    %1585 = vdwg.mxu0
    %1586 = vmatprep.subr.bf16.mxu0 %v1282
    %1587 = vmatpush1.bf16.msra.mxu0 %v1281
    %1588 = vmatprep.subr.bf16.mxu0 %v1286
    %1589 = vmatpush1.bf16.msra.mxu0 %v1285
    %1590 = vmatprep.subr.bf16.mxu0 %v1290
    %1591 = vmatpush1.bf16.msra.mxu0 %v1289
    %1592 = vmatprep.subr.bf16.mxu0 %v1294
    %1593 = vmatpush1.bf16.msra.mxu0 %v1293
    %1594 = vmatprep.subr.bf16.mxu0 %v1298
    %1595 = vmatpush1.bf16.msra.mxu0 %v1297
    %1596 = vmatprep.subr.bf16.mxu0 %v1302
    %1597 = vmatpush1.bf16.msra.mxu0 %v1301
    %1598 = vmatprep.subr.bf16.mxu0 %v1306
    %1599 = vmatpush1.bf16.msra.mxu0 %v1305
    %1600 = vmatprep.subr.bf16.mxu0 %v1310
    %1601 = vmatpush1.bf16.msra.mxu0 %v1309
    %1602 = vmatprep.subr.bf16.mxu0 %v1314
    %1603 = vmatpush1.bf16.msra.mxu0 %v1313
    %1604 = vmatprep.subr.bf16.mxu0 %v1318
    %1605 = vmatpush1.bf16.msra.mxu0 %v1317
    %1606 = vmatprep.subr.bf16.mxu0 %v1322
    %1607 = vmatpush1.bf16.msra.mxu0 %v1321
    %1608 = vmatprep.subr.bf16.mxu0 %v1326
    %1609 = vmatpush1.bf16.msra.mxu0 %v1325
    %1610 = vmatprep.subr.bf16.mxu0 %v1330
    %1611 = vmatpush1.bf16.msra.mxu0 %v1329
    %1612 = vmatprep.subr.bf16.mxu0 %v1334
    %1613 = vmatpush1.bf16.msra.mxu0 %v1333
    %1614 = vmatprep.subr.bf16.mxu0 %v1338
    %1615 = vmatpush1.bf16.msra.mxu0 %v1337
    %1616 = vmatprep.subr.bf16.mxu0 %v1342
    %1617 = vmatpush1.bf16.msra.mxu0 %v1341
    %1618 = vmatprep.mubr.bf16.mxu0 %v654
    %1619 = vmatmul.mubr.bf16.gmra.mrb[0].mxu0 %v653
    %v1620 = vpop.f32.mrb[0].mxu0
    %v1621 = vadd.f32 %v1508, %v1620
    %v1622 = vpop.f32.mrb[0].mxu0
    %v1623 = vadd.f32 %v1510, %v1622
    %v1624 = vpop.f32.mrb[0].mxu0
    %v1625 = vadd.f32 %v1512, %v1624
    %v1626 = vpop.f32.mrb[0].mxu0
    %v1627 = vadd.f32 %v1514, %v1626
    %1628 = vmatprep.mubr.bf16.mxu0 %v658
    %1629 = vmatmul.mubr.bf16.gmra.mrb[0].mxu0 %v657
    %v1630 = vpop.f32.mrb[0].mxu0
    %v1631 = vadd.f32 %v1518, %v1630
    %v1632 = vpop.f32.mrb[0].mxu0
    %v1633 = vadd.f32 %v1520, %v1632
    %v1634 = vpop.f32.mrb[0].mxu0
    %v1635 = vadd.f32 %v1522, %v1634
    %v1636 = vpop.f32.mrb[0].mxu0
    %v1637 = vadd.f32 %v1524, %v1636
    %1638 = vmatprep.mubr.bf16.mxu0 %v662
    %1639 = vmatmul.mubr.bf16.gmra.mrb[0].mxu0 %v661
    %v1640 = vpop.f32.mrb[0].mxu0
    %v1641 = vadd.f32 %v1528, %v1640
    %v1642 = vpop.f32.mrb[0].mxu0
    %v1643 = vadd.f32 %v1530, %v1642
    %v1644 = vpop.f32.mrb[0].mxu0
    %v1645 = vadd.f32 %v1532, %v1644
    %v1646 = vpop.f32.mrb[0].mxu0
    %v1647 = vadd.f32 %v1534, %v1646
    %1648 = vmatprep.mubr.bf16.mxu0 %v666
    %1649 = vmatmul.mubr.bf16.gmra.mrb[0].mxu0 %v665
    %v1650 = vpop.f32.mrb[0].mxu0
    %v1651 = vadd.f32 %v1538, %v1650
    %v1652 = vpop.f32.mrb[0].mxu0
    %v1653 = vadd.f32 %v1540, %v1652
    %v1654 = vpop.f32.mrb[0].mxu0
    %v1655 = vadd.f32 %v1542, %v1654
    %v1656 = vpop.f32.mrb[0].mxu0
    %v1657 = vadd.f32 %v1544, %v1656
    %1658 = vmatprep.mubr.bf16.mxu0 %v670
    %1659 = vmatmul.mubr.bf16.gmra.mrb[0].mxu0 %v669
    %v1660 = vpop.f32.mrb[0].mxu0
    %v1661 = vadd.f32 %v1548, %v1660
    %v1662 = vpop.f32.mrb[0].mxu0
    %v1663 = vadd.f32 %v1550, %v1662
    %v1664 = vpop.f32.mrb[0].mxu0
    %v1665 = vadd.f32 %v1552, %v1664
    %v1666 = vpop.f32.mrb[0].mxu0
    %v1667 = vadd.f32 %v1554, %v1666
    %1668 = vmatprep.mubr.bf16.mxu0 %v674
    %1669 = vmatmul.mubr.bf16.gmra.mrb[0].mxu0 %v673
    %v1670 = vpop.f32.mrb[0].mxu0
    %v1671 = vadd.f32 %v1558, %v1670
    %v1672 = vpop.f32.mrb[0].mxu0
    %v1673 = vadd.f32 %v1560, %v1672
    %v1674 = vpop.f32.mrb[0].mxu0
    %v1675 = vadd.f32 %v1562, %v1674
    %v1676 = vpop.f32.mrb[0].mxu0
    %v1677 = vadd.f32 %v1564, %v1676
    %1678 = vmatprep.mubr.bf16.mxu0 %v678
    %1679 = vmatmul.mubr.bf16.gmra.mrb[0].mxu0 %v677
    %v1680 = vpop.f32.mrb[0].mxu0
    %v1681 = vadd.f32 %v1568, %v1680
    %v1682 = vpop.f32.mrb[0].mxu0
    %v1683 = vadd.f32 %v1570, %v1682
    %v1684 = vpop.f32.mrb[0].mxu0
    %v1685 = vadd.f32 %v1572, %v1684
    %v1686 = vpop.f32.mrb[0].mxu0
    %v1687 = vadd.f32 %v1574, %v1686
    %1688 = vmatprep.mubr.bf16.mxu0 %v682
    %1689 = vmatmul.mubr.bf16.gmra.mrb[0].mxu0 %v681
    %v1690 = vpop.f32.mrb[0].mxu0
    %v1691 = vadd.f32 %v1578, %v1690
    %v1692 = vpop.f32.mrb[0].mxu0
    %v1693 = vadd.f32 %v1580, %v1692
    %v1694 = vpop.f32.mrb[0].mxu0
    %v1695 = vadd.f32 %v1582, %v1694
    %v1696 = vpop.f32.mrb[0].mxu0
    %v1697 = vadd.f32 %v1584, %v1696
    %1698 = vdwg.mxu0
    %1699 = vmatprep.subr.bf16.mxu0 %v1220
    %1700 = vmatpush1.bf16.msra.mxu0 %v1219
    %1701 = vmatprep.subr.bf16.mxu0 %v1224
    %1702 = vmatpush1.bf16.msra.mxu0 %v1223
    %1703 = vmatprep.subr.bf16.mxu0 %v1228
    %1704 = vmatpush1.bf16.msra.mxu0 %v1227
    %1705 = vmatprep.subr.bf16.mxu0 %v1232
    %1706 = vmatpush1.bf16.msra.mxu0 %v1231
    %1707 = vmatprep.subr.bf16.mxu0 %v1236
    %1708 = vmatpush1.bf16.msra.mxu0 %v1235
    %1709 = vmatprep.subr.bf16.mxu0 %v1240
    %1710 = vmatpush1.bf16.msra.mxu0 %v1239
    %1711 = vmatprep.subr.bf16.mxu0 %v1244
    %1712 = vmatpush1.bf16.msra.mxu0 %v1243
    %1713 = vmatprep.subr.bf16.mxu0 %v1248
    %1714 = vmatpush1.bf16.msra.mxu0 %v1247
    %1715 = vmatprep.subr.bf16.mxu0 %v1252
    %1716 = vmatpush1.bf16.msra.mxu0 %v1251
    %1717 = vmatprep.subr.bf16.mxu0 %v1256
    %1718 = vmatpush1.bf16.msra.mxu0 %v1255
    %1719 = vmatprep.subr.bf16.mxu0 %v1260
    %1720 = vmatpush1.bf16.msra.mxu0 %v1259
    %1721 = vmatprep.subr.bf16.mxu0 %v1264
    %1722 = vmatpush1.bf16.msra.mxu0 %v1263
    %1723 = vmatprep.subr.bf16.mxu0 %v1268
    %1724 = vmatpush1.bf16.msra.mxu0 %v1267
    %1725 = vmatprep.subr.bf16.mxu0 %v1272
    %1726 = vmatpush1.bf16.msra.mxu0 %v1271
    %1727 = vmatprep.subr.bf16.mxu0 %v1276
    %1728 = vmatpush1.bf16.msra.mxu0 %v1275
    %1729 = vmatprep.subr.bf16.mxu0 %v1280
    %1730 = vmatpush1.bf16.msra.mxu0 %v1279
    %1731 = vmatprep.mubr.bf16.mxu0 %v652
    %1732 = vmatmul.mubr.bf16.gmra.mrb[0].mxu0 %v651
    %v1733 = vpop.f32.mrb[0].mxu0
    %v1734 = vadd.f32 %v824, %v1733
    %v1735 = vpop.f32.mrb[0].mxu0
    %v1736 = vadd.f32 %v828, %v1735
    %v1737 = vpop.f32.mrb[0].mxu0
    %v1738 = vadd.f32 %v824, %v1737
    %v1739 = vpop.f32.mrb[0].mxu0
    %v1740 = vadd.f32 %v828, %v1739
    %1741 = vmatprep.mubr.bf16.mxu0 %v656
    %1742 = vmatmul.mubr.bf16.gmra.mrb[0].mxu0 %v655
    %v1743 = vpop.f32.mrb[0].mxu0
    %v1744 = vadd.f32 %v824, %v1743
    %v1745 = vpop.f32.mrb[0].mxu0
    %v1746 = vadd.f32 %v828, %v1745
    %v1747 = vpop.f32.mrb[0].mxu0
    %v1748 = vadd.f32 %v824, %v1747
    %v1749 = vpop.f32.mrb[0].mxu0
    %v1750 = vadd.f32 %v828, %v1749
    %1751 = vmatprep.mubr.bf16.mxu0 %v660
    %1752 = vmatmul.mubr.bf16.gmra.mrb[0].mxu0 %v659
    %v1753 = vpop.f32.mrb[0].mxu0
    %v1754 = vadd.f32 %v824, %v1753
    %v1755 = vpop.f32.mrb[0].mxu0
    %v1756 = vadd.f32 %v828, %v1755
    %v1757 = vpop.f32.mrb[0].mxu0
    %v1758 = vadd.f32 %v824, %v1757
    %v1759 = vpop.f32.mrb[0].mxu0
    %v1760 = vadd.f32 %v828, %v1759
    %1761 = vmatprep.mubr.bf16.mxu0 %v664
    %1762 = vmatmul.mubr.bf16.gmra.mrb[0].mxu0 %v663
    %v1763 = vpop.f32.mrb[0].mxu0
    %v1764 = vadd.f32 %v824, %v1763
    %v1765 = vpop.f32.mrb[0].mxu0
    %v1766 = vadd.f32 %v828, %v1765
    %v1767 = vpop.f32.mrb[0].mxu0
    %v1768 = vadd.f32 %v824, %v1767
    %v1769 = vpop.f32.mrb[0].mxu0
    %v1770 = vadd.f32 %v828, %v1769
    %1771 = vmatprep.mubr.bf16.mxu0 %v668
    %1772 = vmatmul.mubr.bf16.gmra.mrb[0].mxu0 %v667
    %v1773 = vpop.f32.mrb[0].mxu0
    %v1774 = vadd.f32 %v824, %v1773
    %v1775 = vpop.f32.mrb[0].mxu0
    %v1776 = vadd.f32 %v828, %v1775
    %v1777 = vpop.f32.mrb[0].mxu0
    %v1778 = vadd.f32 %v824, %v1777
    %v1779 = vpop.f32.mrb[0].mxu0
    %v1780 = vadd.f32 %v828, %v1779
    %1781 = vmatprep.mubr.bf16.mxu0 %v672
    %1782 = vmatmul.mubr.bf16.gmra.mrb[0].mxu0 %v671
    %v1783 = vpop.f32.mrb[0].mxu0
    %v1784 = vadd.f32 %v824, %v1783
    %v1785 = vpop.f32.mrb[0].mxu0
    %v1786 = vadd.f32 %v828, %v1785
    %v1787 = vpop.f32.mrb[0].mxu0
    %v1788 = vadd.f32 %v824, %v1787
    %v1789 = vpop.f32.mrb[0].mxu0
    %v1790 = vadd.f32 %v828, %v1789
    %1791 = vmatprep.mubr.bf16.mxu0 %v676
    %1792 = vmatmul.mubr.bf16.gmra.mrb[0].mxu0 %v675
    %v1793 = vpop.f32.mrb[0].mxu0
    %v1794 = vadd.f32 %v824, %v1793
    %v1795 = vpop.f32.mrb[0].mxu0
    %v1796 = vadd.f32 %v828, %v1795
    %v1797 = vpop.f32.mrb[0].mxu0
    %v1798 = vadd.f32 %v824, %v1797
    %v1799 = vpop.f32.mrb[0].mxu0
    %v1800 = vadd.f32 %v828, %v1799
    %1801 = vmatprep.mubr.bf16.mxu0 %v680
    %1802 = vmatmul.mubr.bf16.gmra.mrb[0].mxu0 %v679
    %v1803 = vpop.f32.mrb[0].mxu0
    %v1804 = vadd.f32 %v824, %v1803
    %v1805 = vpop.f32.mrb[0].mxu0
    %v1806 = vadd.f32 %v828, %v1805
    %v1807 = vpop.f32.mrb[0].mxu0
    %v1808 = vadd.f32 %v824, %v1807
    %v1809 = vpop.f32.mrb[0].mxu0
    %v1810 = vadd.f32 %v828, %v1809
    %1811 = vdwg.mxu0
    %1812 = vmatprep.subr.bf16.mxu0 %v1284
    %1813 = vmatpush1.bf16.msra.mxu0 %v1283
    %1814 = vmatprep.subr.bf16.mxu0 %v1288
    %1815 = vmatpush1.bf16.msra.mxu0 %v1287
    %1816 = vmatprep.subr.bf16.mxu0 %v1292
    %1817 = vmatpush1.bf16.msra.mxu0 %v1291
    %1818 = vmatprep.subr.bf16.mxu0 %v1296
    %1819 = vmatpush1.bf16.msra.mxu0 %v1295
    %1820 = vmatprep.subr.bf16.mxu0 %v1300
    %1821 = vmatpush1.bf16.msra.mxu0 %v1299
    %1822 = vmatprep.subr.bf16.mxu0 %v1304
    %1823 = vmatpush1.bf16.msra.mxu0 %v1303
    %1824 = vmatprep.subr.bf16.mxu0 %v1308
    %1825 = vmatpush1.bf16.msra.mxu0 %v1307
    %1826 = vmatprep.subr.bf16.mxu0 %v1312
    %1827 = vmatpush1.bf16.msra.mxu0 %v1311
    %1828 = vmatprep.subr.bf16.mxu0 %v1316
    %1829 = vmatpush1.bf16.msra.mxu0 %v1315
    %1830 = vmatprep.subr.bf16.mxu0 %v1320
    %1831 = vmatpush1.bf16.msra.mxu0 %v1319
    %1832 = vmatprep.subr.bf16.mxu0 %v1324
    %1833 = vmatpush1.bf16.msra.mxu0 %v1323
    %1834 = vmatprep.subr.bf16.mxu0 %v1328
    %1835 = vmatpush1.bf16.msra.mxu0 %v1327
    %1836 = vmatprep.subr.bf16.mxu0 %v1332
    %1837 = vmatpush1.bf16.msra.mxu0 %v1331
    %1838 = vmatprep.subr.bf16.mxu0 %v1336
    %1839 = vmatpush1.bf16.msra.mxu0 %v1335
    %1840 = vmatprep.subr.bf16.mxu0 %v1340
    %1841 = vmatpush1.bf16.msra.mxu0 %v1339
    %1842 = vmatprep.subr.bf16.mxu0 %v1344
    %1843 = vmatpush1.bf16.msra.mxu0 %v1343
    %1844 = vmatprep.mubr.bf16.mxu0 %v654
    %1845 = vmatmul.mubr.bf16.gmra.mrb[0].mxu0 %v653
    %v1846 = vpop.f32.mrb[0].mxu0
    %v1847 = vadd.f32 %v1734, %v1846
    %v1848 = vpop.f32.mrb[0].mxu0
    %v1849 = vadd.f32 %v1736, %v1848
    %v1850 = vpop.f32.mrb[0].mxu0
    %v1851 = vadd.f32 %v1738, %v1850
    %v1852 = vpop.f32.mrb[0].mxu0
    %v1853 = vadd.f32 %v1740, %v1852
    %1854 = vmatprep.mubr.bf16.mxu0 %v658
    %1855 = vmatmul.mubr.bf16.gmra.mrb[0].mxu0 %v657
    %v1856 = vpop.f32.mrb[0].mxu0
    %v1857 = vadd.f32 %v1744, %v1856
    %v1858 = vpop.f32.mrb[0].mxu0
    %v1859 = vadd.f32 %v1746, %v1858
    %v1860 = vpop.f32.mrb[0].mxu0
    %v1861 = vadd.f32 %v1748, %v1860
    %v1862 = vpop.f32.mrb[0].mxu0
    %v1863 = vadd.f32 %v1750, %v1862
    %1864 = vmatprep.mubr.bf16.mxu0 %v662
    %1865 = vmatmul.mubr.bf16.gmra.mrb[0].mxu0 %v661
    %v1866 = vpop.f32.mrb[0].mxu0
    %v1867 = vadd.f32 %v1754, %v1866
    %v1868 = vpop.f32.mrb[0].mxu0
    %v1869 = vadd.f32 %v1756, %v1868
    %v1870 = vpop.f32.mrb[0].mxu0
    %v1871 = vadd.f32 %v1758, %v1870
    %v1872 = vpop.f32.mrb[0].mxu0
    %v1873 = vadd.f32 %v1760, %v1872
    %1874 = vmatprep.mubr.bf16.mxu0 %v666
    %1875 = vmatmul.mubr.bf16.gmra.mrb[0].mxu0 %v665
    %v1876 = vpop.f32.mrb[0].mxu0
    %v1877 = vadd.f32 %v1764, %v1876
    %v1878 = vpop.f32.mrb[0].mxu0
    %v1879 = vadd.f32 %v1766, %v1878
    %v1880 = vpop.f32.mrb[0].mxu0
    %v1881 = vadd.f32 %v1768, %v1880
    %v1882 = vpop.f32.mrb[0].mxu0
    %v1883 = vadd.f32 %v1770, %v1882
    %1884 = vmatprep.mubr.bf16.mxu0 %v670
    %1885 = vmatmul.mubr.bf16.gmra.mrb[0].mxu0 %v669
    %v1886 = vpop.f32.mrb[0].mxu0
    %v1887 = vadd.f32 %v1774, %v1886
    %v1888 = vpop.f32.mrb[0].mxu0
    %v1889 = vadd.f32 %v1776, %v1888
    %v1890 = vpop.f32.mrb[0].mxu0
    %v1891 = vadd.f32 %v1778, %v1890
    %v1892 = vpop.f32.mrb[0].mxu0
    %v1893 = vadd.f32 %v1780, %v1892
    %1894 = vmatprep.mubr.bf16.mxu0 %v674
    %1895 = vmatmul.mubr.bf16.gmra.mrb[0].mxu0 %v673
    %v1896 = vpop.f32.mrb[0].mxu0
    %v1897 = vadd.f32 %v1784, %v1896
    %v1898 = vpop.f32.mrb[0].mxu0
    %v1899 = vadd.f32 %v1786, %v1898
    %v1900 = vpop.f32.mrb[0].mxu0
    %v1901 = vadd.f32 %v1788, %v1900
    %v1902 = vpop.f32.mrb[0].mxu0
    %v1903 = vadd.f32 %v1790, %v1902
    %1904 = vmatprep.mubr.bf16.mxu0 %v678
    %1905 = vmatmul.mubr.bf16.gmra.mrb[0].mxu0 %v677
    %v1906 = vpop.f32.mrb[0].mxu0
    %v1907 = vadd.f32 %v1794, %v1906
    %v1908 = vpop.f32.mrb[0].mxu0
    %v1909 = vadd.f32 %v1796, %v1908
    %v1910 = vpop.f32.mrb[0].mxu0
    %v1911 = vadd.f32 %v1798, %v1910
    %v1912 = vpop.f32.mrb[0].mxu0
    %v1913 = vadd.f32 %v1800, %v1912
    %1914 = vmatprep.mubr.bf16.mxu0 %v682
    %1915 = vmatmul.mubr.bf16.gmra.mrb[0].mxu0 %v681
    %v1916 = vpop.f32.mrb[0].mxu0
    %v1917 = vadd.f32 %v1804, %v1916
    %v1918 = vpop.f32.mrb[0].mxu0
    %v1919 = vadd.f32 %v1806, %v1918
    %v1920 = vpop.f32.mrb[0].mxu0
    %v1921 = vadd.f32 %v1808, %v1920
    %v1922 = vpop.f32.mrb[0].mxu0
    %v1923 = vadd.f32 %v1810, %v1922
    %1924 = vdwg.mxu0
    %v1925 = vmax.f32 %v1621, 0.0
    %v1926 = vmax.f32 %v1623, 0.0
    %v1927 = vmax.f32 %v1847, 0.0
    %v1928 = vmax.f32 %v1849, 0.0
    %v1929 = vmax.f32 %v1625, 0.0
    %v1930 = vmax.f32 %v1627, 0.0
    %v1931 = vmax.f32 %v1851, 0.0
    %v1932 = vmax.f32 %v1853, 0.0
    %v1933 = vmax.f32 %v1631, 0.0
    %v1934 = vmax.f32 %v1633, 0.0
    %v1935 = vmax.f32 %v1857, 0.0
    %v1936 = vmax.f32 %v1859, 0.0
    %v1937 = vmax.f32 %v1635, 0.0
    %v1938 = vmax.f32 %v1637, 0.0
    %v1939 = vmax.f32 %v1861, 0.0
    %v1940 = vmax.f32 %v1863, 0.0
    %v1941 = vmax.f32 %v1641, 0.0
    %v1942 = vmax.f32 %v1643, 0.0
    %v1943 = vmax.f32 %v1867, 0.0
    %v1944 = vmax.f32 %v1869, 0.0
    %v1945 = vmax.f32 %v1645, 0.0
    %v1946 = vmax.f32 %v1647, 0.0
    %v1947 = vmax.f32 %v1871, 0.0
    %v1948 = vmax.f32 %v1873, 0.0
    %v1949 = vmax.f32 %v1651, 0.0
    %v1950 = vmax.f32 %v1653, 0.0
    %v1951 = vmax.f32 %v1877, 0.0
    %v1952 = vmax.f32 %v1879, 0.0
    %v1953 = vmax.f32 %v1655, 0.0
    %v1954 = vmax.f32 %v1657, 0.0
    %v1955 = vmax.f32 %v1881, 0.0
    %v1956 = vmax.f32 %v1883, 0.0
    %v1957 = vmax.f32 %v1661, 0.0
    %v1958 = vmax.f32 %v1663, 0.0
    %v1959 = vmax.f32 %v1887, 0.0
    %v1960 = vmax.f32 %v1889, 0.0
    %v1961 = vmax.f32 %v1665, 0.0
    %v1962 = vmax.f32 %v1667, 0.0
    %v1963 = vmax.f32 %v1891, 0.0
    %v1964 = vmax.f32 %v1893, 0.0
    %v1965 = vmax.f32 %v1671, 0.0
    %v1966 = vmax.f32 %v1673, 0.0
    %v1967 = vmax.f32 %v1897, 0.0
    %v1968 = vmax.f32 %v1899, 0.0
    %v1969 = vmax.f32 %v1675, 0.0
    %v1970 = vmax.f32 %v1677, 0.0
    %v1971 = vmax.f32 %v1901, 0.0
    %v1972 = vmax.f32 %v1903, 0.0
    %v1973 = vmax.f32 %v1681, 0.0
    %v1974 = vmax.f32 %v1683, 0.0
    %v1975 = vmax.f32 %v1907, 0.0
    %v1976 = vmax.f32 %v1909, 0.0
    %v1977 = vmax.f32 %v1685, 0.0
    %v1978 = vmax.f32 %v1687, 0.0
    %v1979 = vmax.f32 %v1911, 0.0
    %v1980 = vmax.f32 %v1913, 0.0
    %v1981 = vmax.f32 %v1691, 0.0
    %v1982 = vmax.f32 %v1693, 0.0
    %v1983 = vmax.f32 %v1917, 0.0
    %v1984 = vmax.f32 %v1919, 0.0
    %v1985 = vmax.f32 %v1695, 0.0
    %v1986 = vmax.f32 %v1697, 0.0
    %v1987 = vmax.f32 %v1921, 0.0
    %v1988 = vmax.f32 %v1923, 0.0
    %v1989 = vpack.c.bf16 %v1929, %v1925
    %v1990 = vpack.c.bf16 %v1930, %v1926
    %v1991 = vpack.c.bf16 %v1931, %v1927
    %v1992 = vpack.c.bf16 %v1932, %v1928
    %v1993 = vpack.c.bf16 %v1937, %v1933
    %v1994 = vpack.c.bf16 %v1938, %v1934
    %v1995 = vpack.c.bf16 %v1939, %v1935
    %v1996 = vpack.c.bf16 %v1940, %v1936
    %v1997 = vpack.c.bf16 %v1945, %v1941
    %v1998 = vpack.c.bf16 %v1946, %v1942
    %v1999 = vpack.c.bf16 %v1947, %v1943
    %v2000 = vpack.c.bf16 %v1948, %v1944
    %v2001 = vpack.c.bf16 %v1953, %v1949
    %v2002 = vpack.c.bf16 %v1954, %v1950
    %v2003 = vpack.c.bf16 %v1955, %v1951
    %v2004 = vpack.c.bf16 %v1956, %v1952
    %v2005 = vpack.c.bf16 %v1961, %v1957
    %v2006 = vpack.c.bf16 %v1962, %v1958
    %v2007 = vpack.c.bf16 %v1963, %v1959
    %v2008 = vpack.c.bf16 %v1964, %v1960
    %v2009 = vpack.c.bf16 %v1969, %v1965
    %v2010 = vpack.c.bf16 %v1970, %v1966
    %v2011 = vpack.c.bf16 %v1971, %v1967
    %v2012 = vpack.c.bf16 %v1972, %v1968
    %v2013 = vpack.c.bf16 %v1977, %v1973
    %v2014 = vpack.c.bf16 %v1978, %v1974
    %v2015 = vpack.c.bf16 %v1979, %v1975
    %v2016 = vpack.c.bf16 %v1980, %v1976
    %v2017 = vpack.c.bf16 %v1985, %v1981
    %v2018 = vpack.c.bf16 %v1986, %v1982
    %v2019 = vpack.c.bf16 %v1987, %v1983
    %v2020 = vpack.c.bf16 %v1988, %v1984
    %v2021 = vld [vmem:[#allocation8] sm:$0xf]
    %v2022 = vld [vmem:[#allocation8 + $0x4] sm:$0xf]
    %v2023 = vld [vmem:[#allocation8 + $0x8] sm:$0xf]
    %v2024 = vld [vmem:[#allocation8 + $0xc] sm:$0xf]
    %v2025 = vld [vmem:[#allocation8 + $0x10] sm:$0xf]
    %v2026 = vld [vmem:[#allocation8 + $0x14] sm:$0xf]
    %v2027 = vld [vmem:[#allocation8 + $0x18] sm:$0xf]
    %v2028 = vld [vmem:[#allocation8 + $0x1c] sm:$0xf]
    %v2029 = vld [vmem:[#allocation8 + $0x20] sm:$0xf]
    %v2030 = vld [vmem:[#allocation8 + $0x24] sm:$0xf]
    %v2031 = vld [vmem:[#allocation8 + $0x28] sm:$0xf]
    %v2032 = vld [vmem:[#allocation8 + $0x2c] sm:$0xf]
    %v2033 = vld [vmem:[#allocation8 + $0x30] sm:$0xf]
    %v2034 = vld [vmem:[#allocation8 + $0x34] sm:$0xf]
    %v2035 = vld [vmem:[#allocation8 + $0x38] sm:$0xf]
    %v2036 = vld [vmem:[#allocation8 + $0x3c] sm:$0xf]
    %v2037 = vld [vmem:[#allocation8 + $0x40] sm:$0xf]
    %v2038 = vld [vmem:[#allocation8 + $0x44] sm:$0xf]
    %v2039 = vld [vmem:[#allocation8 + $0x48] sm:$0xf]
    %v2040 = vld [vmem:[#allocation8 + $0x4c] sm:$0xf]
    %v2041 = vld [vmem:[#allocation8 + $0x50] sm:$0xf]
    %v2042 = vld [vmem:[#allocation8 + $0x54] sm:$0xf]
    %v2043 = vld [vmem:[#allocation8 + $0x58] sm:$0xf]
    %v2044 = vld [vmem:[#allocation8 + $0x5c] sm:$0xf]
    %v2045 = vld [vmem:[#allocation8 + $0x60] sm:$0xf]
    %v2046 = vld [vmem:[#allocation8 + $0x64] sm:$0xf]
    %v2047 = vld [vmem:[#allocation8 + $0x68] sm:$0xf]
    %v2048 = vld [vmem:[#allocation8 + $0x6c] sm:$0xf]
    %v2049 = vld [vmem:[#allocation8 + $0x70] sm:$0xf]
    %v2050 = vld [vmem:[#allocation8 + $0x74] sm:$0xf]
    %v2051 = vld [vmem:[#allocation8 + $0x78] sm:$0xf]
    %v2052 = vld [vmem:[#allocation8 + $0x7c] sm:$0xf]
    %v2053 = vld [vmem:[#allocation8 + $0x80] sm:$0xf]
    %v2054 = vld [vmem:[#allocation8 + $0x84] sm:$0xf]
    %v2055 = vld [vmem:[#allocation8 + $0x88] sm:$0xf]
    %v2056 = vld [vmem:[#allocation8 + $0x8c] sm:$0xf]
    %v2057 = vld [vmem:[#allocation8 + $0x90] sm:$0xf]
    %v2058 = vld [vmem:[#allocation8 + $0x94] sm:$0xf]
    %v2059 = vld [vmem:[#allocation8 + $0x98] sm:$0xf]
    %v2060 = vld [vmem:[#allocation8 + $0x9c] sm:$0xf]
    %v2061 = vld [vmem:[#allocation8 + $0xa0] sm:$0xf]
    %v2062 = vld [vmem:[#allocation8 + $0xa4] sm:$0xf]
    %v2063 = vld [vmem:[#allocation8 + $0xa8] sm:$0xf]
    %v2064 = vld [vmem:[#allocation8 + $0xac] sm:$0xf]
    %v2065 = vld [vmem:[#allocation8 + $0xb0] sm:$0xf]
    %v2066 = vld [vmem:[#allocation8 + $0xb4] sm:$0xf]
    %v2067 = vld [vmem:[#allocation8 + $0xb8] sm:$0xf]
    %v2068 = vld [vmem:[#allocation8 + $0xbc] sm:$0xf]
    %v2069 = vld [vmem:[#allocation8 + $0xc0] sm:$0xf]
    %v2070 = vld [vmem:[#allocation8 + $0xc4] sm:$0xf]
    %v2071 = vld [vmem:[#allocation8 + $0xc8] sm:$0xf]
    %v2072 = vld [vmem:[#allocation8 + $0xcc] sm:$0xf]
    %v2073 = vld [vmem:[#allocation8 + $0xd0] sm:$0xf]
    %v2074 = vld [vmem:[#allocation8 + $0xd4] sm:$0xf]
    %v2075 = vld [vmem:[#allocation8 + $0xd8] sm:$0xf]
    %v2076 = vld [vmem:[#allocation8 + $0xdc] sm:$0xf]
    %v2077 = vld [vmem:[#allocation8 + $0xe0] sm:$0xf]
    %v2078 = vld [vmem:[#allocation8 + $0xe4] sm:$0xf]
    %v2079 = vld [vmem:[#allocation8 + $0xe8] sm:$0xf]
    %v2080 = vld [vmem:[#allocation8 + $0xec] sm:$0xf]
    %v2081 = vld [vmem:[#allocation8 + $0xf0] sm:$0xf]
    %v2082 = vld [vmem:[#allocation8 + $0xf4] sm:$0xf]
    %v2083 = vld [vmem:[#allocation8 + $0xf8] sm:$0xf]
    %v2084 = vld [vmem:[#allocation8 + $0xfc] sm:$0xf]
    %v2085 = vld [vmem:[%s6] sm:$0x1]
    %v2087 = vlaneseq
    %v2088 = vshrl.u32 %v2087, 7
    %v2089 = vsub.s32 0, %v2088
    %v2090 = vrot.slane %v2085, %v2089
    %v2156 = vunpack.c.l.b16 %v2021
    %v2157 = vunpack.c.l.b16 %v2022
    %v2158 = vunpack.c.l.b16 %v2023
    %v2159 = vunpack.c.l.b16 %v2024
    %v2160 = vunpack.c.l.b16 %v2025
    %v2161 = vunpack.c.l.b16 %v2026
    %v2162 = vunpack.c.l.b16 %v2027
    %v2163 = vunpack.c.l.b16 %v2028
    %v2164 = vunpack.c.l.b16 %v2029
    %v2165 = vunpack.c.l.b16 %v2030
    %v2166 = vunpack.c.l.b16 %v2031
    %v2167 = vunpack.c.l.b16 %v2032
    %v2168 = vunpack.c.l.b16 %v2033
    %v2169 = vunpack.c.l.b16 %v2034
    %v2170 = vunpack.c.l.b16 %v2035
    %v2171 = vunpack.c.l.b16 %v2036
    %v2172 = vunpack.c.l.b16 %v2037
    %v2173 = vunpack.c.l.b16 %v2038
    %v2174 = vunpack.c.l.b16 %v2039
    %v2175 = vunpack.c.l.b16 %v2040
    %v2176 = vunpack.c.l.b16 %v2041
    %v2177 = vunpack.c.l.b16 %v2042
    %v2178 = vunpack.c.l.b16 %v2043
    %v2179 = vunpack.c.l.b16 %v2044
    %v2180 = vunpack.c.l.b16 %v2045
    %v2181 = vunpack.c.l.b16 %v2046
    %v2182 = vunpack.c.l.b16 %v2047
    %v2183 = vunpack.c.l.b16 %v2048
    %v2184 = vunpack.c.l.b16 %v2049
    %v2185 = vunpack.c.l.b16 %v2050
    %v2186 = vunpack.c.l.b16 %v2051
    %v2187 = vunpack.c.l.b16 %v2052
    %v2188 = vunpack.c.l.b16 %v2053
    %v2189 = vunpack.c.l.b16 %v2054
    %v2190 = vunpack.c.l.b16 %v2055
    %v2191 = vunpack.c.l.b16 %v2056
    %v2192 = vunpack.c.l.b16 %v2057
    %v2193 = vunpack.c.l.b16 %v2058
    %v2194 = vunpack.c.l.b16 %v2059
    %v2195 = vunpack.c.l.b16 %v2060
    %v2196 = vunpack.c.l.b16 %v2061
    %v2197 = vunpack.c.l.b16 %v2062
    %v2198 = vunpack.c.l.b16 %v2063
    %v2199 = vunpack.c.l.b16 %v2064
    %v2200 = vunpack.c.l.b16 %v2065
    %v2201 = vunpack.c.l.b16 %v2066
    %v2202 = vunpack.c.l.b16 %v2067
    %v2203 = vunpack.c.l.b16 %v2068
    %v2204 = vunpack.c.l.b16 %v2069
    %v2205 = vunpack.c.l.b16 %v2070
    %v2206 = vunpack.c.l.b16 %v2071
    %v2207 = vunpack.c.l.b16 %v2072
    %v2208 = vunpack.c.l.b16 %v2073
    %v2209 = vunpack.c.l.b16 %v2074
    %v2210 = vunpack.c.l.b16 %v2075
    %v2211 = vunpack.c.l.b16 %v2076
    %v2212 = vunpack.c.l.b16 %v2077
    %v2213 = vunpack.c.l.b16 %v2078
    %v2214 = vunpack.c.l.b16 %v2079
    %v2215 = vunpack.c.l.b16 %v2080
    %v2216 = vunpack.c.l.b16 %v2081
    %v2217 = vunpack.c.l.b16 %v2082
    %v2218 = vunpack.c.l.b16 %v2083
    %v2219 = vunpack.c.l.b16 %v2084
    %v2220 = vpack.c.b16 %v2157, %v2156
    %v2221 = vpack.c.b16 %v2159, %v2158
    %v2222 = vpack.c.b16 %v2161, %v2160
    %v2223 = vpack.c.b16 %v2163, %v2162
    %v2224 = vpack.c.b16 %v2165, %v2164
    %v2225 = vpack.c.b16 %v2167, %v2166
    %v2226 = vpack.c.b16 %v2169, %v2168
    %v2227 = vpack.c.b16 %v2171, %v2170
    %v2228 = vpack.c.b16 %v2173, %v2172
    %v2229 = vpack.c.b16 %v2175, %v2174
    %v2230 = vpack.c.b16 %v2177, %v2176
    %v2231 = vpack.c.b16 %v2179, %v2178
    %v2232 = vpack.c.b16 %v2181, %v2180
    %v2233 = vpack.c.b16 %v2183, %v2182
    %v2234 = vpack.c.b16 %v2185, %v2184
    %v2235 = vpack.c.b16 %v2187, %v2186
    %v2236 = vpack.c.b16 %v2189, %v2188
    %v2237 = vpack.c.b16 %v2191, %v2190
    %v2238 = vpack.c.b16 %v2193, %v2192
    %v2239 = vpack.c.b16 %v2195, %v2194
    %v2240 = vpack.c.b16 %v2197, %v2196
    %v2241 = vpack.c.b16 %v2199, %v2198
    %v2242 = vpack.c.b16 %v2201, %v2200
    %v2243 = vpack.c.b16 %v2203, %v2202
    %v2244 = vpack.c.b16 %v2205, %v2204
    %v2245 = vpack.c.b16 %v2207, %v2206
    %v2246 = vpack.c.b16 %v2209, %v2208
    %v2247 = vpack.c.b16 %v2211, %v2210
    %v2248 = vpack.c.b16 %v2213, %v2212
    %v2249 = vpack.c.b16 %v2215, %v2214
    %v2250 = vpack.c.b16 %v2217, %v2216
    %v2251 = vpack.c.b16 %v2219, %v2218
    %2284 = vmatprep.subr.bf16.mxu0 0
    %2285 = vmatpush1.bf16.msra.mxu0 %v2220
    %2286 = vmatprep.subr.bf16.mxu0 0
    %2287 = vmatpush1.bf16.msra.mxu0 %v2221
    %2288 = vmatprep.subr.bf16.mxu0 0
    %2289 = vmatpush1.bf16.msra.mxu0 %v2222
    %2290 = vmatprep.subr.bf16.mxu0 0
    %2291 = vmatpush1.bf16.msra.mxu0 %v2223
    %2292 = vmatprep.subr.bf16.mxu0 0
    %2293 = vmatpush1.bf16.msra.mxu0 %v2224
    %2294 = vmatprep.subr.bf16.mxu0 0
    %2295 = vmatpush1.bf16.msra.mxu0 %v2225
    %2296 = vmatprep.subr.bf16.mxu0 0
    %2297 = vmatpush1.bf16.msra.mxu0 %v2226
    %2298 = vmatprep.subr.bf16.mxu0 0
    %2299 = vmatpush1.bf16.msra.mxu0 %v2227
    %2300 = vmatprep.subr.bf16.mxu0 0
    %2301 = vmatpush1.bf16.msra.mxu0 %v2228
    %2302 = vmatprep.subr.bf16.mxu0 0
    %2303 = vmatpush1.bf16.msra.mxu0 %v2229
    %2304 = vmatprep.subr.bf16.mxu0 0
    %2305 = vmatpush1.bf16.msra.mxu0 %v2230
    %2306 = vmatprep.subr.bf16.mxu0 0
    %2307 = vmatpush1.bf16.msra.mxu0 %v2231
    %2308 = vmatprep.subr.bf16.mxu0 0
    %2309 = vmatpush1.bf16.msra.mxu0 %v2232
    %2310 = vmatprep.subr.bf16.mxu0 0
    %2311 = vmatpush1.bf16.msra.mxu0 %v2233
    %2312 = vmatprep.subr.bf16.mxu0 0
    %2313 = vmatpush1.bf16.msra.mxu0 %v2234
    %2314 = vmatprep.subr.bf16.mxu0 0
    %2315 = vmatpush1.bf16.msra.mxu0 %v2235
    %2316 = vmatprep.mubr.bf16.mxu0 %v1990
    %2317 = vmatmul.mubr.bf16.gmra.mrb[0].mxu0 %v1989
    %v2318 = vpop.f32.mrb[0].mxu0
    %v2319 = vadd.f32 %v2090, %v2318
    %v2320 = vpop.f32.mrb[0].mxu0
    %v2321 = vpop.f32.mrb[0].mxu0
    %v2322 = vadd.f32 %v2090, %v2321
    %v2323 = vpop.f32.mrb[0].mxu0
    %2324 = vmatprep.mubr.bf16.mxu0 %v1994
    %2325 = vmatmul.mubr.bf16.gmra.mrb[0].mxu0 %v1993
    %v2326 = vpop.f32.mrb[0].mxu0
    %v2327 = vadd.f32 %v2090, %v2326
    %v2328 = vpop.f32.mrb[0].mxu0
    %v2329 = vpop.f32.mrb[0].mxu0
    %v2330 = vadd.f32 %v2090, %v2329
    %v2331 = vpop.f32.mrb[0].mxu0
    %2332 = vmatprep.mubr.bf16.mxu0 %v1998
    %2333 = vmatmul.mubr.bf16.gmra.mrb[0].mxu0 %v1997
    %v2334 = vpop.f32.mrb[0].mxu0
    %v2335 = vadd.f32 %v2090, %v2334
    %v2336 = vpop.f32.mrb[0].mxu0
    %v2337 = vpop.f32.mrb[0].mxu0
    %v2338 = vadd.f32 %v2090, %v2337
    %v2339 = vpop.f32.mrb[0].mxu0
    %2340 = vmatprep.mubr.bf16.mxu0 %v2002
    %2341 = vmatmul.mubr.bf16.gmra.mrb[0].mxu0 %v2001
    %v2342 = vpop.f32.mrb[0].mxu0
    %v2343 = vadd.f32 %v2090, %v2342
    %v2344 = vpop.f32.mrb[0].mxu0
    %v2345 = vpop.f32.mrb[0].mxu0
    %v2346 = vadd.f32 %v2090, %v2345
    %v2347 = vpop.f32.mrb[0].mxu0
    %2348 = vmatprep.mubr.bf16.mxu0 %v2006
    %2349 = vmatmul.mubr.bf16.gmra.mrb[0].mxu0 %v2005
    %v2350 = vpop.f32.mrb[0].mxu0
    %v2351 = vadd.f32 %v2090, %v2350
    %v2352 = vpop.f32.mrb[0].mxu0
    %v2353 = vpop.f32.mrb[0].mxu0
    %v2354 = vadd.f32 %v2090, %v2353
    %v2355 = vpop.f32.mrb[0].mxu0
    %2356 = vmatprep.mubr.bf16.mxu0 %v2010
    %2357 = vmatmul.mubr.bf16.gmra.mrb[0].mxu0 %v2009
    %v2358 = vpop.f32.mrb[0].mxu0
    %v2359 = vadd.f32 %v2090, %v2358
    %v2360 = vpop.f32.mrb[0].mxu0
    %v2361 = vpop.f32.mrb[0].mxu0
    %v2362 = vadd.f32 %v2090, %v2361
    %v2363 = vpop.f32.mrb[0].mxu0
    %2364 = vmatprep.mubr.bf16.mxu0 %v2014
    %2365 = vmatmul.mubr.bf16.gmra.mrb[0].mxu0 %v2013
    %v2366 = vpop.f32.mrb[0].mxu0
    %v2367 = vadd.f32 %v2090, %v2366
    %v2368 = vpop.f32.mrb[0].mxu0
    %v2369 = vpop.f32.mrb[0].mxu0
    %v2370 = vadd.f32 %v2090, %v2369
    %v2371 = vpop.f32.mrb[0].mxu0
    %2372 = vmatprep.mubr.bf16.mxu0 %v2018
    %2373 = vmatmul.mubr.bf16.gmra.mrb[0].mxu0 %v2017
    %v2374 = vpop.f32.mrb[0].mxu0
    %v2375 = vadd.f32 %v2090, %v2374
    %v2376 = vpop.f32.mrb[0].mxu0
    %v2377 = vpop.f32.mrb[0].mxu0
    %v2378 = vadd.f32 %v2090, %v2377
    %v2379 = vpop.f32.mrb[0].mxu0
    %2380 = vdwg.mxu0
    %2381 = vmatprep.subr.bf16.mxu0 0
    %2382 = vmatpush1.bf16.msra.mxu0 %v2236
    %2383 = vmatprep.subr.bf16.mxu0 0
    %2384 = vmatpush1.bf16.msra.mxu0 %v2237
    %2385 = vmatprep.subr.bf16.mxu0 0
    %2386 = vmatpush1.bf16.msra.mxu0 %v2238
    %2387 = vmatprep.subr.bf16.mxu0 0
    %2388 = vmatpush1.bf16.msra.mxu0 %v2239
    %2389 = vmatprep.subr.bf16.mxu0 0
    %2390 = vmatpush1.bf16.msra.mxu0 %v2240
    %2391 = vmatprep.subr.bf16.mxu0 0
    %2392 = vmatpush1.bf16.msra.mxu0 %v2241
    %2393 = vmatprep.subr.bf16.mxu0 0
    %2394 = vmatpush1.bf16.msra.mxu0 %v2242
    %2395 = vmatprep.subr.bf16.mxu0 0
    %2396 = vmatpush1.bf16.msra.mxu0 %v2243
    %2397 = vmatprep.subr.bf16.mxu0 0
    %2398 = vmatpush1.bf16.msra.mxu0 %v2244
    %2399 = vmatprep.subr.bf16.mxu0 0
    %2400 = vmatpush1.bf16.msra.mxu0 %v2245
    %2401 = vmatprep.subr.bf16.mxu0 0
    %2402 = vmatpush1.bf16.msra.mxu0 %v2246
    %2403 = vmatprep.subr.bf16.mxu0 0
    %2404 = vmatpush1.bf16.msra.mxu0 %v2247
    %2405 = vmatprep.subr.bf16.mxu0 0
    %2406 = vmatpush1.bf16.msra.mxu0 %v2248
    %2407 = vmatprep.subr.bf16.mxu0 0
    %2408 = vmatpush1.bf16.msra.mxu0 %v2249
    %2409 = vmatprep.subr.bf16.mxu0 0
    %2410 = vmatpush1.bf16.msra.mxu0 %v2250
    %2411 = vmatprep.subr.bf16.mxu0 0
    %2412 = vmatpush1.bf16.msra.mxu0 %v2251
    %2413 = vmatprep.mubr.bf16.mxu0 %v1992
    %2414 = vmatmul.mubr.bf16.gmra.mrb[0].mxu0 %v1991
    %v2415 = vpop.f32.mrb[0].mxu0
    %v2416 = vadd.f32 %v2319, %v2415
    %v2417 = vpop.f32.mrb[0].mxu0
    %v2418 = vpop.f32.mrb[0].mxu0
    %v2419 = vadd.f32 %v2322, %v2418
    %v2420 = vpop.f32.mrb[0].mxu0
    %2421 = vmatprep.mubr.bf16.mxu0 %v1996
    %2422 = vmatmul.mubr.bf16.gmra.mrb[0].mxu0 %v1995
    %v2423 = vpop.f32.mrb[0].mxu0
    %v2424 = vadd.f32 %v2327, %v2423
    %v2425 = vpop.f32.mrb[0].mxu0
    %v2426 = vpop.f32.mrb[0].mxu0
    %v2427 = vadd.f32 %v2330, %v2426
    %v2428 = vpop.f32.mrb[0].mxu0
    %2429 = vmatprep.mubr.bf16.mxu0 %v2000
    %2430 = vmatmul.mubr.bf16.gmra.mrb[0].mxu0 %v1999
    %v2431 = vpop.f32.mrb[0].mxu0
    %v2432 = vadd.f32 %v2335, %v2431
    %v2433 = vpop.f32.mrb[0].mxu0
    %v2434 = vpop.f32.mrb[0].mxu0
    %v2435 = vadd.f32 %v2338, %v2434
    %v2436 = vpop.f32.mrb[0].mxu0
    %2437 = vmatprep.mubr.bf16.mxu0 %v2004
    %2438 = vmatmul.mubr.bf16.gmra.mrb[0].mxu0 %v2003
    %v2439 = vpop.f32.mrb[0].mxu0
    %v2440 = vadd.f32 %v2343, %v2439
    %v2441 = vpop.f32.mrb[0].mxu0
    %v2442 = vpop.f32.mrb[0].mxu0
    %v2443 = vadd.f32 %v2346, %v2442
    %v2444 = vpop.f32.mrb[0].mxu0
    %2445 = vmatprep.mubr.bf16.mxu0 %v2008
    %2446 = vmatmul.mubr.bf16.gmra.mrb[0].mxu0 %v2007
    %v2447 = vpop.f32.mrb[0].mxu0
    %v2448 = vadd.f32 %v2351, %v2447
    %v2449 = vpop.f32.mrb[0].mxu0
    %v2450 = vpop.f32.mrb[0].mxu0
    %v2451 = vadd.f32 %v2354, %v2450
    %v2452 = vpop.f32.mrb[0].mxu0
    %2453 = vmatprep.mubr.bf16.mxu0 %v2012
    %2454 = vmatmul.mubr.bf16.gmra.mrb[0].mxu0 %v2011
    %v2455 = vpop.f32.mrb[0].mxu0
    %v2456 = vadd.f32 %v2359, %v2455
    %v2457 = vpop.f32.mrb[0].mxu0
    %v2458 = vpop.f32.mrb[0].mxu0
    %v2459 = vadd.f32 %v2362, %v2458
    %v2460 = vpop.f32.mrb[0].mxu0
    %2461 = vmatprep.mubr.bf16.mxu0 %v2016
    %2462 = vmatmul.mubr.bf16.gmra.mrb[0].mxu0 %v2015
    %v2463 = vpop.f32.mrb[0].mxu0
    %v2464 = vadd.f32 %v2367, %v2463
    %v2465 = vpop.f32.mrb[0].mxu0
    %v2466 = vpop.f32.mrb[0].mxu0
    %v2467 = vadd.f32 %v2370, %v2466
    %v2468 = vpop.f32.mrb[0].mxu0
    %2469 = vmatprep.mubr.bf16.mxu0 %v2020
    %2470 = vmatmul.mubr.bf16.gmra.mrb[0].mxu0 %v2019
    %v2471 = vpop.f32.mrb[0].mxu0
    %v2472 = vadd.f32 %v2375, %v2471
    %v2473 = vpop.f32.mrb[0].mxu0
    %v2474 = vpop.f32.mrb[0].mxu0
    %v2475 = vadd.f32 %v2378, %v2474
    %v2476 = vpop.f32.mrb[0].mxu0
    %2477 = vdwg.mxu0
    %2478 = vst [vmem:[#allocation10] sm:$0xff] %v2416
    %2479 = vst [vmem:[#allocation10 + $0x8] sm:$0xff] %v2419
    %2480 = vst [vmem:[#allocation10 + $0x10] sm:$0xff] %v2424
    %2481 = vst [vmem:[#allocation10 + $0x18] sm:$0xff] %v2427
    %2482 = vst [vmem:[#allocation10 + $0x20] sm:$0xff] %v2432
    %2483 = vst [vmem:[#allocation10 + $0x28] sm:$0xff] %v2435
    %2484 = vst [vmem:[#allocation10 + $0x30] sm:$0xff] %v2440
    %2485 = vst [vmem:[#allocation10 + $0x38] sm:$0xff] %v2443
    %2486 = vst [vmem:[#allocation10 + $0x40] sm:$0xff] %v2448
    %2487 = vst [vmem:[#allocation10 + $0x48] sm:$0xff] %v2451
    %2488 = vst [vmem:[#allocation10 + $0x50] sm:$0xff] %v2456
    %2489 = vst [vmem:[#allocation10 + $0x58] sm:$0xff] %v2459
    %2490 = vst [vmem:[#allocation10 + $0x60] sm:$0xff] %v2464
    %2491 = vst [vmem:[#allocation10 + $0x68] sm:$0xff] %v2467
    %2492 = vst [vmem:[#allocation10 + $0x70] sm:$0xff] %v2472
    %2493 = vst [vmem:[#allocation10 + $0x78] sm:$0xff] %v2475
    // Predicated region
    $region46: #{tpu_custom_call.1} parent=1 // pred_check
      _
    $region47: #{tpu_custom_call.1} parent=1 // pred_check_branch
      %2495 = sbr.rel (0) target = $region49
    $region48: #{tpu_custom_call.1} parent=1 // pred_region
      %s2497 = ssub.s32 2048, 2048
      %2498 = vsyncadd [#allocation4], %s2497
      %s2499 = sshll.u32 [#allocation10], 4
      %s2500 = int_to_ptr.vmem [resolvable:$true] %s2499
      %2505 = dma.vmem_to_hbm [thread:$0]  %s2500, 2048, %s7, [#allocation4], 128, 128, 8
    $region49: #{tpu_custom_call.1} parent=1 // pred_fallthru
      _
    // Predicated region
    $region50: #{tpu_custom_call.1} parent=1 // pred_check
      _
    $region51: #{tpu_custom_call.1} parent=1 // pred_check_branch
      %2507 = sbr.rel (0) target = $region53
    $region52: #{tpu_custom_call.1} parent=1 // pred_region
      %2508 = dma.done [#allocation4], 2048
    $region53: #{tpu_custom_call.1} parent=1 // pred_fallthru
      _
    %2509 = vsyncpa [#allocation3], 1
    %2510 = vsyncpa [#allocation6], 1
    %2511 = vsyncpa [#allocation9], 1
    %2512 = vsyncpa [#allocation4], 1

</llo_original>
